<compile_context>
chip_gen: v7x
topology: tpu7x:2x2x1
jax: 0.10.0
libtpu: 0.0.40
codegen_flags: <defaults>
</compile_context>

<pallas_src>
import functools
import math

import jax
import jax.numpy as jnp
from jax import lax
from jax.experimental import pallas as pl
from jax.experimental.pallas import tpu as pltpu

_F32_MIN = float(jnp.finfo(jnp.float32).min)


def _flash_attn_kernel(q_ref, k_ref, mask_ref, v_ref, o_ref,
                       m_sc, l_sc, acc_sc, qs_sc, *, scale, exp_dtype):
    """One grid step = (batch b, q-tile qi, head-block h, kv-tile ki); ki innermost."""
    kv = pl.program_id(3)
    tk = k_ref.shape[2]

    @pl.when(kv == 0)
    def _init():
        m_sc[...] = jnp.full_like(m_sc, -jnp.inf)
        l_sc[...] = jnp.zeros_like(l_sc)
        acc_sc[...] = jnp.zeros_like(acc_sc)
        # Hoist the 1/sqrt(D) scale out of the kv loop: applied once per
        # (b, qi, h) block instead of once per kv step.
        qs_sc[...] = q_ref[0] * scale

    q = qs_sc[...]                               # (HB, TQ, D), input dtype, pre-scaled
    k = k_ref[0]                                 # (HB, TK, D)
    v = v_ref[0]                                 # (HB, TK, D)

    # Additive bias for this kv window (broadcast over the head block).
    # When the mask block is a resident (TQ, Sk) slab (its block index is
    # constant across both the h and ki grid axes, so it is DMA'd from HBM
    # only once per (b, qi)), slice the current 128-aligned window in VMEM.
    if mask_ref.shape[3] == tk:
        bias = mask_ref[0, 0].astype(jnp.float32)                        # (TQ, TK)
    else:
        start = pl.multiple_of(kv * tk, tk)
        bias = mask_ref[0, 0, :, pl.ds(start, tk)].astype(jnp.float32)   # (TQ, TK)

    # Scores: contract D directly (no explicit k transpose), f32 accumulation.
    s = lax.dot_general(q, k, (((2,), (2,)), ((0,), (0,))),
                        preferred_element_type=jnp.float32)              # (HB, TQ, TK)
    s = s + bias[None, :, :]

    # Online softmax (flash pattern) with f32 running stats.
    m_prev = m_sc[...]
    m_new = jnp.maximum(m_prev, jnp.max(s, axis=-1, keepdims=True))
    # Finite floor: a fully -inf-masked row yields p == 0 (NaN only appears in
    # that row's final normalization, matching torch) instead of poisoning the
    # whole tile through exp(-inf - -inf).
    m_new = jnp.maximum(m_new, _F32_MIN)
    alpha = jnp.exp(m_prev - m_new)
    # exp on the EUP; bf16 exp (v6e/v7x) roughly doubles EUP throughput and
    # feeds the PV matmul directly without an extra full-tile VPU cast.
    p = jnp.exp((s - m_new).astype(exp_dtype))
    l_sc[...] = alpha * l_sc[...] + jnp.sum(p.astype(jnp.float32),
                                            axis=-1, keepdims=True)

    pv = lax.dot_general(p.astype(v.dtype), v,
                         (((2,), (1,)), ((0,), (0,))),
                         preferred_element_type=jnp.float32)             # (HB, TQ, D)
    acc_sc[...] = alpha * acc_sc[...] + pv
    m_sc[...] = m_new

    @pl.when(kv == pl.num_programs(3) - 1)
    def _finalize():
        # Exact division: runs once per output tile, keeps parity with torch.
        o_ref[0] = (acc_sc[...] / l_sc[...]).astype(o_ref.dtype)


def _device_kind():
    try:
        return jax.devices()[0].device_kind.lower()
    except Exception:
        return ""


def _physical_vmem_bytes():
    # v7x has 64 MiB of VMEM per TensorCore; v4/v5e/v5p/v6e have 128 MiB.
    return (64 if "v7" in _device_kind() else 128) * 1024 * 1024


def _supports_bf16_eup():
    kind = _device_kind()
    # v5e and older lack a bf16 EUP/VPU path; a bf16 exp there only adds casts.
    return not any(tag in kind for tag in ("v2", "v3", "v4", "v5"))


def _tile_candidates(dim, caps):
    cands = [c for c in caps if c <= dim and dim % c == 0]
    return cands if cands else [dim]


def _select_tiling(H, Sq, Sk, D, q_bytes, mask_bytes, budget_bytes):
    tq_cands = _tile_candidates(Sq, (512, 256, 128, 64, 32, 16, 8))
    tk_cands = _tile_candidates(Sk, (2048, 1024, 512, 256, 128))
    hb_cands = _tile_candidates(H, (8, 4, 2, 1))

    def working_set(hb, tq, tk):
        resident = (Sk // tk > 1) and (tk % 128 == 0)
        mask_cols = Sk if resident else tk
        dbl = 2                                           # double-buffered pipeline
        q_in = dbl * hb * tq * D * q_bytes
        kv_in = dbl * 2 * hb * tk * D * q_bytes
        o_out = dbl * hb * tq * D * q_bytes
        m_in = dbl * tq * mask_cols * mask_bytes
        acc = hb * tq * D * 4
        stats = 2 * hb * tq * 4
        q_sc = hb * tq * D * q_bytes
        score = 3 * hb * tq * tk * 4                      # s / p / f32 intermediates
        return q_in + kv_in + o_out + m_in + acc + stats + q_sc + score

    best_key, best = None, None
    for tq in tq_cands:
        for hb in hb_cands:
            for tk in tk_cands:
                if working_set(hb, tq, tk) > budget_bytes:
                    continue
                # K/V HBM traffic scales with Sq/tq (dominant stream once the
                # mask is resident); then minimize grid-step count.
                key = (Sq // tq, (Sq // tq) * (H // hb) * (Sk // tk))
                if best_key is None or key < best_key:
                    best_key, best = key, (hb, tq, tk)
    if best is None:
        best = (hb_cands[-1], tq_cands[-1], tk_cands[-1])  # smallest legal tiling
    return best


def attention_subgraph(query_states, key_states, attention_mask, value_states,
                       *, tile_q=None, tile_k=None, head_block=None,
                       resident_mask=None, vmem_limit_bytes=None):
    B, H, Sq, D = query_states.shape
    assert key_states.shape[:2] == (B, H) and key_states.shape[3] == D
    Sk = key_states.shape[2]
    assert value_states.shape == (B, H, Sk, D)
    assert attention_mask.shape == (B, 1, Sq, Sk)

    q_bytes = jnp.dtype(query_states.dtype).itemsize
    mask_bytes = jnp.dtype(attention_mask.dtype).itemsize

    if vmem_limit_bytes is None:
        # Leave headroom for compiler-internal scratch; cap at 100 MiB.
        phys = _physical_vmem_bytes()
        vmem_limit_bytes = max(32 << 20, min(phys - (16 << 20), 100 << 20))
    budget = int(vmem_limit_bytes * 0.85)

    hb, tq, tk = _select_tiling(H, Sq, Sk, D, q_bytes, mask_bytes, budget)
    if tile_q is not None:
        tq = tile_q
    if tile_k is not None:
        tk = tile_k
    if head_block is not None:
        hb = head_block
    assert Sq % tq == 0 and Sk % tk == 0 and H % hb == 0
    assert tq % 8 == 0 or tq == Sq
    assert tk % 128 == 0 or tk == Sk

    if resident_mask is None:
        resident_mask = (Sk // tk > 1) and (tk % 128 == 0)

    if resident_mask:
        # Resident per-(b, qi) mask slab: fetched once, reused across h and ki.
        mask_spec = pl.BlockSpec((1, 1, tq, Sk), lambda b, qi, h, ki: (b, 0, qi, 0))
    else:
        mask_spec = pl.BlockSpec((1, 1, tq, tk), lambda b, qi, h, ki: (b, 0, qi, ki))

    exp_dtype = (jnp.bfloat16
                 if (query_states.dtype == jnp.bfloat16 and _supports_bf16_eup())
                 else jnp.float32)

    kernel = functools.partial(_flash_attn_kernel,
                               scale=1.0 / math.sqrt(D), exp_dtype=exp_dtype)

    # NOTE (v7x): B * (Sq/tq) * (H/hb) parallel steps should stay >= 2 so both
    # TensorCores get work; with typical llama shapes this is always true.
    grid = (B, Sq // tq, H // hb, Sk // tk)

    return pl.pallas_call(
        kernel,
        out_shape=jax.ShapeDtypeStruct((B, H, Sq, D), query_states.dtype),
        grid_spec=pltpu.PrefetchScalarGridSpec(
            num_scalar_prefetch=0,
            grid=grid,
            in_specs=[
                pl.BlockSpec((1, hb, tq, D), lambda b, qi, h, ki: (b, h, qi, 0)),  # q
                pl.BlockSpec((1, hb, tk, D), lambda b, qi, h, ki: (b, h, ki, 0)),  # k
                mask_spec,                                                          # mask
                pl.BlockSpec((1, hb, tk, D), lambda b, qi, h, ki: (b, h, ki, 0)),  # v
            ],
            out_specs=pl.BlockSpec((1, hb, tq, D), lambda b, qi, h, ki: (b, h, qi, 0)),
            scratch_shapes=[
                pltpu.VMEM((hb, tq, 1), jnp.float32),            # running max m
                pltpu.VMEM((hb, tq, 1), jnp.float32),            # running denom l
                pltpu.VMEM((hb, tq, D), jnp.float32),            # output accumulator
                pltpu.VMEM((hb, tq, D), query_states.dtype),     # pre-scaled q
            ],
        ),
        compiler_params=pltpu.CompilerParams(
            dimension_semantics=("parallel", "parallel", "parallel", "arbitrary"),
            vmem_limit_bytes=int(vmem_limit_bytes),
        ),
    )(query_states, key_states, attention_mask, value_states)


def _reference(query_states, key_states, attention_mask, value_states, head_dim):
    q = query_states.astype(jnp.float32)
    k = key_states.astype(jnp.float32)
    v = value_states.astype(jnp.float32)
    scores = jnp.einsum("bhqd,bhkd->bhqk", q, k) / math.sqrt(head_dim)
    scores = scores + attention_mask.astype(jnp.float32)
    probs = jax.nn.softmax(scores, axis=-1)
    return jnp.einsum("bhqk,bhkd->bhqd", probs, v)


if __name__ == "__main__":
    # --- Test 1: small f32 shapes, single kv tile. -------------------------
    B, H, Sq, Sk, D = 2, 4, 8, 8, 32
    kq, kk, kv_ = jax.random.split(jax.random.PRNGKey(0), 3)
    q = jax.random.normal(kq, (B, H, Sq, D), dtype=jnp.float32)
    k = jax.random.normal(kk, (B, H, Sk, D), dtype=jnp.float32)
    v = jax.random.normal(kv_, (B, H, Sk, D), dtype=jnp.float32)
    causal = jnp.tril(jnp.ones((Sq, Sk), dtype=jnp.float32))
    mask = jnp.where(causal == 1.0, 0.0, -1e9)[None, None, :, :]
    mask = jnp.broadcast_to(mask, (B, 1, Sq, Sk))

    out = jax.block_until_ready(attention_subgraph(q, k, mask, v))
    ref = _reference(q, k, mask, v, D)
    assert out.shape == (B, H, Sq, D)
    assert jnp.allclose(out, ref, atol=5e-2, rtol=5e-2), "f32 mismatch vs reference"

    # --- Test 2: bf16, multi kv-tile online softmax, head blocking, --------
    # --- resident mask slab with in-kernel pl.ds slicing. ------------------
    B2, H2, Sq2, Sk2, D2 = 1, 4, 16, 256, 128
    k1, k2, k3 = jax.random.split(jax.random.PRNGKey(1), 3)
    q2 = jax.random.normal(k1, (B2, H2, Sq2, D2), dtype=jnp.bfloat16)
    k2_ = jax.random.normal(k2, (B2, H2, Sk2, D2), dtype=jnp.bfloat16)
    v2 = jax.random.normal(k3, (B2, H2, Sk2, D2), dtype=jnp.bfloat16)
    causal2 = jnp.tril(jnp.ones((Sq2, Sk2), dtype=jnp.float32), k=Sk2 - Sq2)
    mask2 = jnp.where(causal2 == 1.0, 0.0, -1e9)[None, None, :, :]
    mask2 = jnp.broadcast_to(mask2, (B2, 1, Sq2, Sk2))

    run2 = functools.partial(attention_subgraph, tile_q=8, tile_k=128, head_block=2)
    try:
        out2 = jax.block_until_ready(run2(q2, k2_, mask2, v2))
    except Exception:
        # Fallback if the local Mosaic toolchain rejects the dynamic lane slice
        # of the resident mask slab; semantics are identical, only mask HBM
        # traffic differs.
        out2 = jax.block_until_ready(run2(q2, k2_, mask2, v2, resident_mask=False))
    ref2 = _reference(q2, k2_, mask2, v2, D2)
    assert out2.shape == (B2, H2, Sq2, D2)
    assert jnp.allclose(out2.astype(jnp.float32), ref2, atol=5e-2, rtol=5e-2), \
        "bf16 mismatch vs reference"

    print("KERNEL_OK")
</pallas_src>

<mosaic_0001>
module attributes {stable_mosaic.version = 11 : i64} {
  func.func @_flash_attn_kernel(%arg0: i32, %arg1: i32, %arg2: i32, %arg3: i32, %arg4: memref<1x4x8x32xf32, #tpu.memory_space<vmem>>, %arg5: memref<1x4x8x32xf32, #tpu.memory_space<vmem>>, %arg6: memref<1x1x8x8xf32, #tpu.memory_space<vmem>>, %arg7: memref<1x4x8x32xf32, #tpu.memory_space<vmem>>, %arg8: memref<1x4x8x32xf32, #tpu.memory_space<vmem>>, %arg9: memref<4x8x1xf32, #tpu.memory_space<vmem>>, %arg10: memref<4x8x1xf32, #tpu.memory_space<vmem>>, %arg11: memref<4x8x32xf32, #tpu.memory_space<vmem>>, %arg12: memref<4x8x32xf32, #tpu.memory_space<vmem>>) attributes {dimension_semantics = [#tpu.dimension_semantics<parallel>, #tpu.dimension_semantics<parallel>, #tpu.dimension_semantics<parallel>, #tpu.dimension_semantics<arbitrary>], iteration_bounds = array<i64: 2, 1, 1, 1>, scalar_prefetch = 0 : i64, scratch_operands = 4 : i64, tpu.core_type = #tpu.core_type<tc>, window_params = [{transform_indices = @transform_0, window_bounds = array<i64: 1, 4, 8, 32>}, {transform_indices = @transform_1, window_bounds = array<i64: 1, 4, 8, 32>}, {transform_indices = @transform_2, window_bounds = array<i64: 1, 1, 8, 8>}, {transform_indices = @transform_3, window_bounds = array<i64: 1, 4, 8, 32>}, {transform_indices = @transform_4, window_bounds = array<i64: 1, 4, 8, 32>}]} {
    %c0_i32 = arith.constant 0 : i32
    %0 = arith.cmpi eq, %arg3, %c0_i32 : i32
    %1 = arith.extui %0 : i1 to i32
    %c0_i32_0 = arith.constant 0 : i32
    %2 = arith.cmpi ne, %1, %c0_i32_0 : i32
    scf.if %2 {
      %cst_39 = arith.constant 0xFF800000 : f32
      %41 = vector.broadcast %cst_39 : f32 to vector<4x8x1xf32>
      %c0_40 = arith.constant 0 : index
      %c0_41 = arith.constant 0 : index
      %c0_42 = arith.constant 0 : index
      %42 = vector.load %arg9[%c0_40, %c0_41, %c0_42] : memref<4x8x1xf32, #tpu.memory_space<vmem>>, vector<4x8x1xf32>
      tpu.vector_store %arg9[%c0_40, %c0_41, %c0_42], %41 {strides = array<i32>} : memref<4x8x1xf32, #tpu.memory_space<vmem>>, vector<4x8x1xf32>,
      %cst_43 = arith.constant 0.000000e+00 : f32
      %43 = vector.broadcast %cst_43 : f32 to vector<4x8x1xf32>
      %c0_44 = arith.constant 0 : index
      %c0_45 = arith.constant 0 : index
      %c0_46 = arith.constant 0 : index
      %44 = vector.load %arg10[%c0_44, %c0_45, %c0_46] : memref<4x8x1xf32, #tpu.memory_space<vmem>>, vector<4x8x1xf32>
      tpu.vector_store %arg10[%c0_44, %c0_45, %c0_46], %43 {strides = array<i32>} : memref<4x8x1xf32, #tpu.memory_space<vmem>>, vector<4x8x1xf32>,
      %cst_47 = arith.constant 0.000000e+00 : f32
      %45 = vector.broadcast %cst_47 : f32 to vector<4x8x32xf32>
      %c0_48 = arith.constant 0 : index
      %c0_49 = arith.constant 0 : index
      %c0_50 = arith.constant 0 : index
      %46 = vector.load %arg11[%c0_48, %c0_49, %c0_50] : memref<4x8x32xf32, #tpu.memory_space<vmem>>, vector<4x8x32xf32>
      tpu.vector_store %arg11[%c0_48, %c0_49, %c0_50], %45 {strides = array<i32>} : memref<4x8x32xf32, #tpu.memory_space<vmem>>, vector<4x8x32xf32>,
      %c0_51 = arith.constant 0 : index
      %c0_52 = arith.constant 0 : index
      %c0_53 = arith.constant 0 : index
      %c0_54 = arith.constant 0 : index
      %47 = vector.load %arg4[%c0_51, %c0_52, %c0_53, %c0_54] : memref<1x4x8x32xf32, #tpu.memory_space<vmem>>, vector<1x4x8x32xf32>
      %48 = vector.shape_cast %47 : vector<1x4x8x32xf32> to vector<4x8x32xf32>
      %cst_55 = arith.constant 0.176776692 : f32
      %49 = vector.broadcast %cst_55 : f32 to vector<4x8x32xf32>
      %50 = arith.mulf %48, %49 : vector<4x8x32xf32>
      %c0_56 = arith.constant 0 : index
      %c0_57 = arith.constant 0 : index
      %c0_58 = arith.constant 0 : index
      %51 = vector.load %arg12[%c0_56, %c0_57, %c0_58] : memref<4x8x32xf32, #tpu.memory_space<vmem>>, vector<4x8x32xf32>
      tpu.vector_store %arg12[%c0_56, %c0_57, %c0_58], %50 {strides = array<i32>} : memref<4x8x32xf32, #tpu.memory_space<vmem>>, vector<4x8x32xf32>,
    } else {
    }
    %c0 = arith.constant 0 : index
    %c0_1 = arith.constant 0 : index
    %c0_2 = arith.constant 0 : index
    %3 = vector.load %arg12[%c0, %c0_1, %c0_2] : memref<4x8x32xf32, #tpu.memory_space<vmem>>, vector<4x8x32xf32>
    %c0_3 = arith.constant 0 : index
    %c0_4 = arith.constant 0 : index
    %c0_5 = arith.constant 0 : index
    %c0_6 = arith.constant 0 : index
    %4 = vector.load %arg5[%c0_3, %c0_4, %c0_5, %c0_6] : memref<1x4x8x32xf32, #tpu.memory_space<vmem>>, vector<1x4x8x32xf32>
    %5 = vector.shape_cast %4 : vector<1x4x8x32xf32> to vector<4x8x32xf32>
    %c0_7 = arith.constant 0 : index
    %c0_8 = arith.constant 0 : index
    %c0_9 = arith.constant 0 : index
    %c0_10 = arith.constant 0 : index
    %6 = vector.load %arg7[%c0_7, %c0_8, %c0_9, %c0_10] : memref<1x4x8x32xf32, #tpu.memory_space<vmem>>, vector<1x4x8x32xf32>
    %7 = vector.shape_cast %6 : vector<1x4x8x32xf32> to vector<4x8x32xf32>
    %c0_11 = arith.constant 0 : index
    %c0_12 = arith.constant 0 : index
    %c0_13 = arith.constant 0 : index
    %c0_14 = arith.constant 0 : index
    %8 = vector.load %arg6[%c0_11, %c0_12, %c0_13, %c0_14] : memref<1x1x8x8xf32, #tpu.memory_space<vmem>>, vector<1x1x8x8xf32>
    %9 = vector.shape_cast %8 : vector<1x1x8x8xf32> to vector<8x8xf32>
    %cst = arith.constant dense<0.000000e+00> : vector<4x8x8xf32>
    %10 = tpu.matmul %3, %5, %cst {dimension_numbers = #tpu.dot_dimension_numbers<[2], [2], [1], [1], [0, 0, 0, 1, 1, 1], [0], [0]>} : vector<4x8x32xf32>, vector<4x8x32xf32>, vector<4x8x8xf32> -> vector<4x8x8xf32>
    %11 = vector.shape_cast %9 : vector<8x8xf32> to vector<1x8x8xf32>
    %12 = vector.broadcast %11 : vector<1x8x8xf32> to vector<4x8x8xf32>
    %13 = arith.addf %10, %12 : vector<4x8x8xf32>
    %c0_15 = arith.constant 0 : index
    %c0_16 = arith.constant 0 : index
    %c0_17 = arith.constant 0 : index
    %14 = vector.load %arg9[%c0_15, %c0_16, %c0_17] : memref<4x8x1xf32, #tpu.memory_space<vmem>>, vector<4x8x1xf32>
    %cst_18 = arith.constant dense<0xFF800000> : vector<4x8xf32>
    %15 = vector.multi_reduction <maximumf>, %13, %cst_18 [2] : vector<4x8x8xf32> to vector<4x8xf32>
    %16 = vector.shape_cast %15 : vector<4x8xf32> to vector<4x8x1xf32>
    %17 = arith.maximumf %14, %16 : vector<4x8x1xf32>
    %cst_19 = arith.constant -3.40282347E+38 : f32
    %18 = vector.broadcast %cst_19 : f32 to vector<4x8x1xf32>
    %19 = arith.maximumf %17, %18 : vector<4x8x1xf32>
    %20 = arith.subf %14, %19 : vector<4x8x1xf32>
    %21 = math.exp %20 : vector<4x8x1xf32>
    %22 = vector.broadcast %19 : vector<4x8x1xf32> to vector<4x8x8xf32>
    %23 = arith.subf %13, %22 : vector<4x8x8xf32>
    %24 = math.exp %23 : vector<4x8x8xf32>
    %c0_20 = arith.constant 0 : index
    %c0_21 = arith.constant 0 : index
    %c0_22 = arith.constant 0 : index
    %25 = vector.load %arg10[%c0_20, %c0_21, %c0_22] : memref<4x8x1xf32, #tpu.memory_space<vmem>>, vector<4x8x1xf32>
    %26 = arith.mulf %21, %25 : vector<4x8x1xf32>
    %cst_23 = arith.constant dense<0.000000e+00> : vector<4x8xf32>
    %27 = vector.multi_reduction <add>, %24, %cst_23 [2] : vector<4x8x8xf32> to vector<4x8xf32>
    %28 = vector.shape_cast %27 : vector<4x8xf32> to vector<4x8x1xf32>
    %29 = arith.addf %26, %28 : vector<4x8x1xf32>
    %c0_24 = arith.constant 0 : index
    %c0_25 = arith.constant 0 : index
    %c0_26 = arith.constant 0 : index
    %30 = vector.load %arg10[%c0_24, %c0_25, %c0_26] : memref<4x8x1xf32, #tpu.memory_space<vmem>>, vector<4x8x1xf32>
    tpu.vector_store %arg10[%c0_24, %c0_25, %c0_26], %29 {strides = array<i32>} : memref<4x8x1xf32, #tpu.memory_space<vmem>>, vector<4x8x1xf32>,
    %cst_27 = arith.constant dense<0.000000e+00> : vector<4x8x32xf32>
    %31 = tpu.matmul %24, %7, %cst_27 {dimension_numbers = #tpu.dot_dimension_numbers<[2], [1], [1], [2], [0, 0, 0, 1, 1, 2], [0], [0]>} : vector<4x8x8xf32>, vector<4x8x32xf32>, vector<4x8x32xf32> -> vector<4x8x32xf32>
    %c0_28 = arith.constant 0 : index
    %c0_29 = arith.constant 0 : index
    %c0_30 = arith.constant 0 : index
    %32 = vector.load %arg11[%c0_28, %c0_29, %c0_30] : memref<4x8x32xf32, #tpu.memory_space<vmem>>, vector<4x8x32xf32>
    %33 = vector.broadcast %21 : vector<4x8x1xf32> to vector<4x8x32xf32>
    %34 = arith.mulf %33, %32 : vector<4x8x32xf32>
    %35 = arith.addf %34, %31 : vector<4x8x32xf32>
    %c0_31 = arith.constant 0 : index
    %c0_32 = arith.constant 0 : index
    %c0_33 = arith.constant 0 : index
    %36 = vector.load %arg11[%c0_31, %c0_32, %c0_33] : memref<4x8x32xf32, #tpu.memory_space<vmem>>, vector<4x8x32xf32>
    tpu.vector_store %arg11[%c0_31, %c0_32, %c0_33], %35 {strides = array<i32>} : memref<4x8x32xf32, #tpu.memory_space<vmem>>, vector<4x8x32xf32>,
    %c0_34 = arith.constant 0 : index
    %c0_35 = arith.constant 0 : index
    %c0_36 = arith.constant 0 : index
    %37 = vector.load %arg9[%c0_34, %c0_35, %c0_36] : memref<4x8x1xf32, #tpu.memory_space<vmem>>, vector<4x8x1xf32>
    tpu.vector_store %arg9[%c0_34, %c0_35, %c0_36], %19 {strides = array<i32>} : memref<4x8x1xf32, #tpu.memory_space<vmem>>, vector<4x8x1xf32>,
    %c0_i32_37 = arith.constant 0 : i32
    %38 = arith.cmpi eq, %arg3, %c0_i32_37 : i32
    %39 = arith.extui %38 : i1 to i32
    %c0_i32_38 = arith.constant 0 : i32
    %40 = arith.cmpi ne, %39, %c0_i32_38 : i32
    scf.if %40 {
      %c0_39 = arith.constant 0 : index
      %c0_40 = arith.constant 0 : index
      %c0_41 = arith.constant 0 : index
      %41 = vector.load %arg11[%c0_39, %c0_40, %c0_41] : memref<4x8x32xf32, #tpu.memory_space<vmem>>, vector<4x8x32xf32>
      %c0_42 = arith.constant 0 : index
      %c0_43 = arith.constant 0 : index
      %c0_44 = arith.constant 0 : index
      %42 = vector.load %arg10[%c0_42, %c0_43, %c0_44] : memref<4x8x1xf32, #tpu.memory_space<vmem>>, vector<4x8x1xf32>
      %43 = vector.broadcast %42 : vector<4x8x1xf32> to vector<4x8x32xf32>
      %44 = arith.divf %41, %43 : vector<4x8x32xf32>
      %c0_45 = arith.constant 0 : index
      %c0_46 = arith.constant 0 : index
      %c0_47 = arith.constant 0 : index
      %c0_48 = arith.constant 0 : index
      %45 = vector.load %arg8[%c0_45, %c0_46, %c0_47, %c0_48] : memref<1x4x8x32xf32, #tpu.memory_space<vmem>>, vector<1x4x8x32xf32>
      %46 = vector.shape_cast %45 : vector<1x4x8x32xf32> to vector<4x8x32xf32>
      %47 = vector.shape_cast %44 : vector<4x8x32xf32> to vector<1x4x8x32xf32>
      tpu.vector_store %arg8[%c0_45, %c0_46, %c0_47, %c0_48], %47 {strides = array<i32>} : memref<1x4x8x32xf32, #tpu.memory_space<vmem>>, vector<1x4x8x32xf32>,
    } else {
    }
    return
  }
  func.func @transform_0(%arg0: i32, %arg1: i32, %arg2: i32, %arg3: i32) -> (i32, i32, i32, i32) {
    %c0_i32 = arith.constant 0 : i32
    %c0_i32_0 = arith.constant 0 : i32
    return %arg0, %arg2, %arg1, %c0_i32 : i32, i32, i32, i32
  }
  func.func @transform_1(%arg0: i32, %arg1: i32, %arg2: i32, %arg3: i32) -> (i32, i32, i32, i32) {
    %c0_i32 = arith.constant 0 : i32
    %c0_i32_0 = arith.constant 0 : i32
    return %arg0, %arg2, %arg3, %c0_i32 : i32, i32, i32, i32
  }
  func.func @transform_2(%arg0: i32, %arg1: i32, %arg2: i32, %arg3: i32) -> (i32, i32, i32, i32) {
    %c0_i32 = arith.constant 0 : i32
    %c0_i32_0 = arith.constant 0 : i32
    return %arg0, %c0_i32, %arg1, %arg3 : i32, i32, i32, i32
  }
  func.func @transform_3(%arg0: i32, %arg1: i32, %arg2: i32, %arg3: i32) -> (i32, i32, i32, i32) {
    %c0_i32 = arith.constant 0 : i32
    %c0_i32_0 = arith.constant 0 : i32
    return %arg0, %arg2, %arg3, %c0_i32 : i32, i32, i32, i32
  }
  func.func @transform_4(%arg0: i32, %arg1: i32, %arg2: i32, %arg3: i32) -> (i32, i32, i32, i32) {
    %c0_i32 = arith.constant 0 : i32
    %c0_i32_0 = arith.constant 0 : i32
    return %arg0, %arg2, %arg1, %c0_i32 : i32, i32, i32, i32
  }
}

</mosaic_0001>

<llo_original>
// kernel: tpu_custom_call.1
$region0: #{tpu_custom_call.1}
  #allocation0 [shape = 'u32[]', space=smem, size = 0x4, offset = 0x4, fixed_abs, tag = 'smem constant byte address 0x4 - core index']
  #allocation1 [shape = 'u32[144,128]{1,0:T(1,128)}', space=vmem, size = 0x12000, scoped, tag = 'internal scratch']
  #allocation2 [shape = 'f32[4,8,1]{2,1,0:T(8,128)}', space=vmem, size = 0x4000, scoped, tag = 'scratch operand']
  #allocation3 [shape = 'f32[4,8,1]{2,1,0:T(8,128)}', space=vmem, size = 0x4000, scoped, tag = 'scratch operand']
  #allocation4 [shape = 'f32[4,8,32]{2,1,0:T(8,128)}', space=vmem, size = 0x4000, scoped, tag = 'scratch operand']
  #allocation5 [shape = 'f32[4,8,32]{2,1,0:T(8,128)}', space=vmem, size = 0x4000, scoped, tag = 'scratch operand']
  %s0 = inlined_call_operand.hbm [shape: f32[2,4,8,32], index: 0, kind: input, shape index: {}]
  %s1 = inlined_call_operand.hbm [shape: f32[2,4,8,32], index: 1, kind: input, shape index: {}]
  %s2 = inlined_call_operand.hbm [shape: f32[2,1,8,8], index: 2, kind: input, shape index: {}]
  %s3 = inlined_call_operand.hbm [shape: f32[2,4,8,32], index: 3, kind: input, shape index: {}]
  %s4 = inlined_call_operand.hbm [shape: f32[2,4,8,32], index: 4, kind: output, shape index: {}]
  %s5 = sld [smem:[#allocation0]]
  $region73: #{tpu_custom_call.1} parent=0
    _
  %s7 = ssub.s32 1, %s5
  %s8 = scalar_select 0, %s7, %s5
  $region1: #{tpu_custom_call.1} parent=0
    #allocation6 [shape = 'u8[32768]{0}', space=vmem, size = 0x8000, scoped, tag = 'input window, operand 0']
    #allocation7 [shape = 's32[2]{0}', space=sflag, size = 0x8, scoped, tag = 'scoped memory for tpu_custom_call.1']
    #allocation8 [shape = 's32[2]{0}', space=sflag, size = 0x8, scoped, tag = 'scoped memory for tpu_custom_call.1']
    #allocation9 [shape = 'u8[32768]{0}', space=vmem, size = 0x8000, scoped, tag = 'input window, operand 1']
    #allocation10 [shape = 's32[2]{0}', space=sflag, size = 0x8, scoped, tag = 'scoped memory for tpu_custom_call.1']
    #allocation11 [shape = 'u8[8192]{0}', space=vmem, size = 0x2000, scoped, tag = 'input window, operand 2']
    #allocation12 [shape = 'u8[32768]{0}', space=vmem, size = 0x8000, scoped, tag = 'input window, operand 3']
    #allocation13 [shape = 's32[2]{0}', space=sflag, size = 0x8, scoped, tag = 'scoped memory for tpu_custom_call.1']
    #allocation14 [shape = 'u8[32768]{0}', space=vmem, size = 0x8000, scoped, tag = 'output window, operand 0']
    %9 = vsyncpa [#allocation7], 0
    %s10 = scalar_lea.sflag [#allocation7], 1
    %11 = vsyncpa %s10, 0
    %12 = vsyncpa [#allocation10], 0
    %s13 = scalar_lea.sflag [#allocation10], 1
    %14 = vsyncpa %s13, 0
    %15 = vsyncpa [#allocation13], 0
    %s16 = scalar_lea.sflag [#allocation13], 1
    %17 = vsyncpa %s16, 0
    %18 = vsyncpa [#allocation8], 0
    %s19 = scalar_lea.sflag [#allocation8], 1
    %20 = vsyncpa %s19, 0
    loop: start=0, step=1, limit=4
    $region2: #{tpu_custom_call.1} parent=1 // loop_pre_header
      _
    $region3: #{tpu_custom_call.1} parent=1 // loop_header
      %s22 = sphi 0, %s26
      %p23 = scmp.ge.s32.totalorder %s22, 4
      %s29 = sphi 0, %s55
      %s30 = sphi 0, %s51
      %s31 = sphi 0, %s47
      %s32 = sphi 0, %s43
      %s33 = sphi 0, %s29
      %s34 = sphi 0, %s30
      %s35 = sphi 0, %s31
      %s36 = sphi 0, %s32
      %s37 = sphi 0, %s33
      %s38 = sphi 0, %s34
      %s39 = sphi 0, %s35
      %s40 = sphi 0, %s36
      %s62 = sphi 0, %s64
      %s65 = sphi 0, %s62
      %s66 = sphi 0, %s65
      %s82 = sphi 0, %s66
      %s92 = sphi 0, %s94
      %s95 = sphi 0, %s92
      %s96 = sphi 0, %s95
      %s112 = sphi 0, %s96
      %s122 = sphi 0, %s124
      %s125 = sphi 0, %s122
      %s126 = sphi 0, %s125
      %s142 = sphi 0, %s126
      %s152 = sphi 0, %s154
      %s155 = sphi 0, %s152
      %s156 = sphi 0, %s155
      %s172 = sphi 0, %s156
      %s182 = sphi 0, %s184
      %s185 = sphi 0, %s182
      %s186 = sphi 0, %s185
      %s202 = sphi 0, %s186
    $region4: #{tpu_custom_call.1} parent=1 // loop_header_branch
      %25 = sbr.rel (%p23) target = $region8
    $region5: #{tpu_custom_call.1} parent=1 // loop_body
      %s27 = ssub.s32 %s22, 1
      %s28 = ssub.s32 %s22, 2
      %s41 = sadd.s32 1, %s32
      %p42 = scmp.ge.s32.totalorder %s41, 1
      %s43 = scalar_select %p42, 0, %s41
      %s44 = sadd.s32 1, %s31
      %s45 = scalar_select %p42, %s44, %s31
      %p46 = scmp.ge.s32.totalorder %s45, 1
      %s47 = scalar_select %p46, 0, %s45
      %s48 = sadd.s32 1, %s30
      %s49 = scalar_select %p46, %s48, %s30
      %p50 = scmp.ge.s32.totalorder %s49, 1
      %s51 = scalar_select %p50, 0, %s49
      %s52 = sadd.s32 1, %s29
      %s53 = scalar_select %p50, %s52, %s29
      %p54 = scmp.ge.s32.totalorder %s53, 2
      %s55 = scalar_select %p54, 0, %s53
      %s56 = ssub.s32 %s29, %s55
      %s57 = ssub.s32 %s31, %s47
      %s58 = sor.u32 %s56, %s57
      %s59 = ssub.s32 %s30, %s51
      %s60 = sor.u32 %s58, %s59
      %p61 = scmp.eq.s32.totalorder %s60, 0
      %s63 = sadd.s32 %s62, 1
      %s64 = scalar_select %p61, %s62, %s63
      %p67 = pneg %p61
      %p68 = scmp.eq.s32.totalorder %s22, 1
      %p69 = por %p67, %p68
      %p70 = scmp.ne.s32.totalorder %s62, %s65
      %p71 = scmp.eq.s32.totalorder %s22, 0
      %p72 = por %p70, %p71
      %p73 = scmp.ne.s32.totalorder %s62, %s65
      %p74 = scmp.eq.s32.totalorder %s27, 1
      %p75 = por %p73, %p74
      %p76 = scmp.ne.s32.totalorder %s65, %s66
      %p77 = scmp.eq.s32.totalorder %s27, 0
      %p78 = por %p76, %p77
      %p79 = scmp.ne.s32.totalorder %s65, %s66
      %p80 = scmp.eq.s32.totalorder %s28, 1
      %p81 = por %p79, %p80
      %p83 = scmp.ne.s32.totalorder %s66, %s82
      %p84 = scmp.eq.s32.totalorder %s28, 0
      %p85 = por %p83, %p84
      %s86 = ssub.s32 %s29, %s55
      %s87 = ssub.s32 %s31, %s47
      %s88 = sor.u32 %s86, %s87
      %s89 = ssub.s32 %s32, %s43
      %s90 = sor.u32 %s88, %s89
      %p91 = scmp.eq.s32.totalorder %s90, 0
      %s93 = sadd.s32 %s92, 1
      %s94 = scalar_select %p91, %s92, %s93
      %p97 = pneg %p91
      %p98 = scmp.eq.s32.totalorder %s22, 1
      %p99 = por %p97, %p98
      %p100 = scmp.ne.s32.totalorder %s92, %s95
      %p101 = scmp.eq.s32.totalorder %s22, 0
      %p102 = por %p100, %p101
      %p103 = scmp.ne.s32.totalorder %s92, %s95
      %p104 = scmp.eq.s32.totalorder %s27, 1
      %p105 = por %p103, %p104
      %p106 = scmp.ne.s32.totalorder %s95, %s96
      %p107 = scmp.eq.s32.totalorder %s27, 0
      %p108 = por %p106, %p107
      %p109 = scmp.ne.s32.totalorder %s95, %s96
      %p110 = scmp.eq.s32.totalorder %s28, 1
      %p111 = por %p109, %p110
      %p113 = scmp.ne.s32.totalorder %s96, %s112
      %p114 = scmp.eq.s32.totalorder %s28, 0
      %p115 = por %p113, %p114
      %s116 = ssub.s32 %s29, %s55
      %s117 = ssub.s32 %s30, %s51
      %s118 = sor.u32 %s116, %s117
      %s119 = ssub.s32 %s32, %s43
      %s120 = sor.u32 %s118, %s119
      %p121 = scmp.eq.s32.totalorder %s120, 0
      %s123 = sadd.s32 %s122, 1
      %s124 = scalar_select %p121, %s122, %s123
      %p127 = pneg %p121
      %p128 = scmp.eq.s32.totalorder %s22, 1
      %p129 = por %p127, %p128
      %p130 = scmp.ne.s32.totalorder %s122, %s125
      %p131 = scmp.eq.s32.totalorder %s22, 0
      %p132 = por %p130, %p131
      %p133 = scmp.ne.s32.totalorder %s122, %s125
      %p134 = scmp.eq.s32.totalorder %s27, 1
      %p135 = por %p133, %p134
      %p136 = scmp.ne.s32.totalorder %s125, %s126
      %p137 = scmp.eq.s32.totalorder %s27, 0
      %p138 = por %p136, %p137
      %p139 = scmp.ne.s32.totalorder %s125, %s126
      %p140 = scmp.eq.s32.totalorder %s28, 1
      %p141 = por %p139, %p140
      %p143 = scmp.ne.s32.totalorder %s126, %s142
      %p144 = scmp.eq.s32.totalorder %s28, 0
      %p145 = por %p143, %p144
      %s146 = ssub.s32 %s29, %s55
      %s147 = ssub.s32 %s31, %s47
      %s148 = sor.u32 %s146, %s147
      %s149 = ssub.s32 %s32, %s43
      %s150 = sor.u32 %s148, %s149
      %p151 = scmp.eq.s32.totalorder %s150, 0
      %s153 = sadd.s32 %s152, 1
      %s154 = scalar_select %p151, %s152, %s153
      %p157 = pneg %p151
      %p158 = scmp.eq.s32.totalorder %s22, 1
      %p159 = por %p157, %p158
      %p160 = scmp.ne.s32.totalorder %s152, %s155
      %p161 = scmp.eq.s32.totalorder %s22, 0
      %p162 = por %p160, %p161
      %p163 = scmp.ne.s32.totalorder %s152, %s155
      %p164 = scmp.eq.s32.totalorder %s27, 1
      %p165 = por %p163, %p164
      %p166 = scmp.ne.s32.totalorder %s155, %s156
      %p167 = scmp.eq.s32.totalorder %s27, 0
      %p168 = por %p166, %p167
      %p169 = scmp.ne.s32.totalorder %s155, %s156
      %p170 = scmp.eq.s32.totalorder %s28, 1
      %p171 = por %p169, %p170
      %p173 = scmp.ne.s32.totalorder %s156, %s172
      %p174 = scmp.eq.s32.totalorder %s28, 0
      %p175 = por %p173, %p174
      %s176 = ssub.s32 %s29, %s55
      %s177 = ssub.s32 %s31, %s47
      %s178 = sor.u32 %s176, %s177
      %s179 = ssub.s32 %s30, %s51
      %s180 = sor.u32 %s178, %s179
      %p181 = scmp.eq.s32.totalorder %s180, 0
      %s183 = sadd.s32 %s182, 1
      %s184 = scalar_select %p181, %s182, %s183
      %p187 = pneg %p181
      %p188 = scmp.eq.s32.totalorder %s22, 1
      %p189 = por %p187, %p188
      %p190 = scmp.ne.s32.totalorder %s182, %s185
      %p191 = scmp.eq.s32.totalorder %s22, 0
      %p192 = por %p190, %p191
      %p193 = scmp.ne.s32.totalorder %s182, %s185
      %p194 = scmp.eq.s32.totalorder %s27, 1
      %p195 = por %p193, %p194
      %p196 = scmp.ne.s32.totalorder %s185, %s186
      %p197 = scmp.eq.s32.totalorder %s27, 0
      %p198 = por %p196, %p197
      %p199 = scmp.ne.s32.totalorder %s185, %s186
      %p200 = scmp.eq.s32.totalorder %s28, 1
      %p201 = por %p199, %p200
      %p203 = scmp.ne.s32.totalorder %s186, %s202
      %p204 = scmp.eq.s32.totalorder %s28, 0
      %p205 = por %p203, %p204
      %p206 = scmp.le.s32.totalorder 1, %s22
      %p207 = scmp.lt.s32.totalorder %s22, 3
      %p208 = pnand %p206, %p207
      %p209 = pneg %p208
      // Predicated region
      $region9: #{tpu_custom_call.1} parent=5 // pred_check
        _
      $region10: #{tpu_custom_call.1} parent=5 // pred_check_branch
        %211 = sbr.rel (%p208) target = $region12
      $region11: #{tpu_custom_call.1} parent=5 // pred_region
        %s212 = ssub.s32 %s22, 1
      $region12: #{tpu_custom_call.1} parent=5 // pred_fallthru
        _
      %p213 = scmp.lt.s32.totalorder %s22, 2
      // Predicated region
      $region13: #{tpu_custom_call.1} parent=5 // pred_check
        %p214 = pneg %p213
      $region14: #{tpu_custom_call.1} parent=5 // pred_check_branch
        %216 = sbr.rel (%p214) target = $region16
      $region15: #{tpu_custom_call.1} parent=5 // pred_region
        // Predicated region
        $region17: #{tpu_custom_call.1} parent=15 // pred_check
          %p217 = pneg %p72
        $region18: #{tpu_custom_call.1} parent=15 // pred_check_branch
          %219 = sbr.rel (%p217) target = $region20
        $region19: #{tpu_custom_call.1} parent=15 // pred_region
          %s220 = sand.u32 %s62, 1
          %s221 = scalar_lea.sflag [#allocation7], %s220
          %s222 = sand.u32 %s62, 1
          %s223 = smul.addr %s222, 32
          %s224 = scalar_lea.vmem [#allocation6], %s223
          %s225 = smul.u32 4, %s31
          %s227 = ssub.s32 512, 512
          %228 = vsyncadd %s221, %s227
          %s229 = sadd.s32 %s30, %s225
          %s230 = smul.addr %s29, 4
          %s231 = sadd.s32 %s229, %s230
          %s232 = smul.addr %s231, 128
          %s233 = scalar_lea.hbm %s0, %s232
          %s234 = sshll.u32 %s224, 4
          %s235 = int_to_ptr.vmem [resolvable:$true] %s234
          %240 = dma.hbm_to_vmem [thread:$0]  %s233, 512, %s235, %s221, 128, 128, 8
        $region20: #{tpu_custom_call.1} parent=15 // pred_fallthru
          _
        // Predicated region
        $region21: #{tpu_custom_call.1} parent=15 // pred_check
          %p241 = pneg %p102
        $region22: #{tpu_custom_call.1} parent=15 // pred_check_branch
          %243 = sbr.rel (%p241) target = $region24
        $region23: #{tpu_custom_call.1} parent=15 // pred_region
          %s244 = sand.u32 %s22, 1
          %s245 = scalar_lea.sflag [#allocation10], %s244
          %s246 = sand.u32 %s92, 1
          %s247 = smul.addr %s246, 32
          %s248 = scalar_lea.vmem [#allocation9], %s247
          %s249 = smul.u32 4, %s31
          %s251 = ssub.s32 512, 512
          %252 = vsyncadd %s245, %s251
          %s253 = sadd.s32 %s32, %s249
          %s254 = smul.addr %s29, 4
          %s255 = sadd.s32 %s253, %s254
          %s256 = smul.addr %s255, 128
          %s257 = scalar_lea.hbm %s1, %s256
          %s258 = sshll.u32 %s248, 4
          %s259 = int_to_ptr.vmem [resolvable:$true] %s258
          %264 = dma.hbm_to_vmem [thread:$0]  %s257, 512, %s259, %s245, 128, 128, 8
        $region24: #{tpu_custom_call.1} parent=15 // pred_fallthru
          _
        // Predicated region
        $region25: #{tpu_custom_call.1} parent=15 // pred_check
          %p265 = pneg %p132
        $region26: #{tpu_custom_call.1} parent=15 // pred_check_branch
          %267 = sbr.rel (%p265) target = $region28
        $region27: #{tpu_custom_call.1} parent=15 // pred_region
          %s268 = sand.u32 %s22, 1
          %s269 = scalar_lea.sflag [#allocation10], %s268
          %s270 = sand.u32 %s122, 1
          %s271 = smul.addr %s270, 8
          %s272 = scalar_lea.vmem [#allocation11], %s271
          %s274 = ssub.s32 128, 128
          %275 = vsyncadd %s269, %s274
          %s276 = sadd.s32 %s32, %s30
          %s277 = sadd.s32 %s276, %s29
          %s278 = smul.addr %s277, 128
          %s279 = scalar_lea.hbm %s2, %s278
          %s281 = sshll.u32 %s272, 4
          %s282 = int_to_ptr.vmem [resolvable:$true] %s281
          %284 = dma.hbm_to_vmem [thread:$0]  %s279, 128, %s282, %s269
        $region28: #{tpu_custom_call.1} parent=15 // pred_fallthru
          _
        // Predicated region
        $region29: #{tpu_custom_call.1} parent=15 // pred_check
          %p285 = pneg %p162
        $region30: #{tpu_custom_call.1} parent=15 // pred_check_branch
          %287 = sbr.rel (%p285) target = $region32
        $region31: #{tpu_custom_call.1} parent=15 // pred_region
          %s288 = sand.u32 %s152, 1
          %s289 = scalar_lea.sflag [#allocation13], %s288
          %s290 = sand.u32 %s152, 1
          %s291 = smul.addr %s290, 32
          %s292 = scalar_lea.vmem [#allocation12], %s291
          %s293 = smul.u32 4, %s31
          %s295 = ssub.s32 512, 512
          %296 = vsyncadd %s289, %s295
          %s297 = sadd.s32 %s32, %s293
          %s298 = smul.addr %s29, 4
          %s299 = sadd.s32 %s297, %s298
          %s300 = smul.addr %s299, 128
          %s301 = scalar_lea.hbm %s3, %s300
          %s302 = sshll.u32 %s292, 4
          %s303 = int_to_ptr.vmem [resolvable:$true] %s302
          %308 = dma.hbm_to_vmem [thread:$0]  %s301, 512, %s303, %s289, 128, 128, 8
        $region32: #{tpu_custom_call.1} parent=15 // pred_fallthru
          _
      $region16: #{tpu_custom_call.1} parent=5 // pred_fallthru
        _
      %p309 = scmp.le.s32.totalorder 1, %s22
      %p310 = scmp.lt.s32.totalorder %s22, 3
      %p311 = pnand %p309, %p310
      %p312 = pneg %p311
      // Predicated region
      $region33: #{tpu_custom_call.1} parent=5 // pred_check
        _
      $region34: #{tpu_custom_call.1} parent=5 // pred_check_branch
        %314 = sbr.rel (%p311) target = $region36
      $region35: #{tpu_custom_call.1} parent=5 // pred_region
        %s315 = ssub.s32 %s22, 1
        %s316 = sand.u32 %s65, 1
        %s317 = scalar_lea.sflag [#allocation7], %s316
        %s318 = sand.u32 %s65, 1
        %s319 = smul.addr %s318, 32
        %s320 = scalar_lea.vmem [#allocation6], %s319
        // Predicated region
        $region37: #{tpu_custom_call.1} parent=35 // pred_check
          %p321 = pneg %p78
        $region38: #{tpu_custom_call.1} parent=35 // pred_check_branch
          %323 = sbr.rel (%p321) target = $region40
        $region39: #{tpu_custom_call.1} parent=35 // pred_region
          %324 = dma.done %s317, 512
        $region40: #{tpu_custom_call.1} parent=35 // pred_fallthru
          _
        %s325 = sand.u32 %s27, 1
        %s326 = scalar_lea.sflag [#allocation10], %s325
        %s327 = sand.u32 %s95, 1
        %s328 = smul.addr %s327, 32
        %s329 = scalar_lea.vmem [#allocation9], %s328
        // Predicated region
        $region41: #{tpu_custom_call.1} parent=35 // pred_check
          %p330 = pneg %p108
        $region42: #{tpu_custom_call.1} parent=35 // pred_check_branch
          %332 = sbr.rel (%p330) target = $region44
        $region43: #{tpu_custom_call.1} parent=35 // pred_region
          %333 = dma.done %s326, 512
        $region44: #{tpu_custom_call.1} parent=35 // pred_fallthru
          _
        %s334 = sand.u32 %s27, 1
        %s335 = scalar_lea.sflag [#allocation10], %s334
        %s336 = sand.u32 %s125, 1
        %s337 = smul.addr %s336, 8
        %s338 = scalar_lea.vmem [#allocation11], %s337
        // Predicated region
        $region45: #{tpu_custom_call.1} parent=35 // pred_check
          %p339 = pneg %p138
        $region46: #{tpu_custom_call.1} parent=35 // pred_check_branch
          %341 = sbr.rel (%p339) target = $region48
        $region47: #{tpu_custom_call.1} parent=35 // pred_region
          %342 = dma.done %s335, 128
        $region48: #{tpu_custom_call.1} parent=35 // pred_fallthru
          _
        %s343 = sand.u32 %s155, 1
        %s344 = scalar_lea.sflag [#allocation13], %s343
        %s345 = sand.u32 %s155, 1
        %s346 = smul.addr %s345, 32
        %s347 = scalar_lea.vmem [#allocation12], %s346
        // Predicated region
        $region49: #{tpu_custom_call.1} parent=35 // pred_check
          %p348 = pneg %p168
        $region50: #{tpu_custom_call.1} parent=35 // pred_check_branch
          %350 = sbr.rel (%p348) target = $region52
        $region51: #{tpu_custom_call.1} parent=35 // pred_region
          %351 = dma.done %s344, 512
        $region52: #{tpu_custom_call.1} parent=35 // pred_fallthru
          _
        %s352 = sand.u32 %s65, 1
        %s353 = scalar_lea.sflag [#allocation7], %s352
        %s354 = sand.u32 %s65, 1
        %s355 = smul.addr %s354, 32
        %s356 = scalar_lea.vmem [#allocation6], %s355
        %p357 = pneg %p78
        %p358 = pneg %p75
        %s359 = sand.u32 %s27, 1
        %s360 = scalar_lea.sflag [#allocation10], %s359
        %s361 = sand.u32 %s95, 1
        %s362 = smul.addr %s361, 32
        %s363 = scalar_lea.vmem [#allocation9], %s362
        %p364 = pneg %p108
        %p365 = pneg %p105
        %s366 = sand.u32 %s27, 1
        %s367 = scalar_lea.sflag [#allocation10], %s366
        %s368 = sand.u32 %s125, 1
        %s369 = smul.addr %s368, 8
        %s370 = scalar_lea.vmem [#allocation11], %s369
        %p371 = pneg %p138
        %p372 = pneg %p135
        %s373 = sand.u32 %s155, 1
        %s374 = scalar_lea.sflag [#allocation13], %s373
        %s375 = sand.u32 %s155, 1
        %s376 = smul.addr %s375, 32
        %s377 = scalar_lea.vmem [#allocation12], %s376
        %p378 = pneg %p168
        %p379 = pneg %p165
        %p380 = pneg %p198
        %p381 = pneg %p195
        %s382 = sand.u32 %s185, 1
        %s383 = scalar_lea.sflag [#allocation8], %s382
        %s384 = sand.u32 %s185, 1
        %s385 = smul.addr %s384, 32
        %s386 = scalar_lea.vmem [#allocation14], %s385
        %s387 = smul.u32 4, %s35
        %s388 = smul.u32 4, %s35
        %s389 = smul.u32 4, %s35
        %s390 = smul.u32 4, %s35
        %p391 = scmp.eq.s32.totalorder %s36, 0
        // Predicated region
        $region53: #{tpu_custom_call.1} parent=35 // pred_check
          %p392 = pneg %p391
        $region54: #{tpu_custom_call.1} parent=35 // pred_check_branch
          %394 = sbr.rel (%p392) target = $region56
        $region55: #{tpu_custom_call.1} parent=35 // pred_region
          %vm395 = vcmask 7168
          %396 = vst.msk [vmem:[#allocation2] sm:$0xff] %vm395, -inf
          %397 = vst.msk [vmem:[#allocation2 + $0x8] sm:$0xff] %vm395, -inf
          %398 = vst.msk [vmem:[#allocation2 + $0x10] sm:$0xff] %vm395, -inf
          %399 = vst.msk [vmem:[#allocation2 + $0x18] sm:$0xff] %vm395, -inf
          %400 = vst.msk [vmem:[#allocation3] sm:$0xff] %vm395, 0.0
          %401 = vst.msk [vmem:[#allocation3 + $0x8] sm:$0xff] %vm395, 0.0
          %402 = vst.msk [vmem:[#allocation3 + $0x10] sm:$0xff] %vm395, 0.0
          %403 = vst.msk [vmem:[#allocation3 + $0x18] sm:$0xff] %vm395, 0.0
          %vm404 = vcmask 261120
          %405 = vst.msk [vmem:[#allocation4] sm:$0xff] %vm404, 0.0
          %406 = vst.msk [vmem:[#allocation4 + $0x8] sm:$0xff] %vm404, 0.0
          %407 = vst.msk [vmem:[#allocation4 + $0x10] sm:$0xff] %vm404, 0.0
          %408 = vst.msk [vmem:[#allocation4 + $0x18] sm:$0xff] %vm404, 0.0
          %v409 = vld [vmem:[%s320] sm:$0xff]
          %v410 = vld [vmem:[%s320 + $0x8] sm:$0xff]
          %v411 = vld [vmem:[%s320 + $0x10] sm:$0xff]
          %v412 = vld [vmem:[%s320 + $0x18] sm:$0xff]
          %v413 = vmul.f32 %v409, 0.17677669
          %v414 = vmul.f32 %v410, 0.17677669
          %v415 = vmul.f32 %v411, 0.17677669
          %v416 = vmul.f32 %v412, 0.17677669
          %417 = vst.msk [vmem:[#allocation5] sm:$0xff] %vm404, %v413
          %418 = vst.msk [vmem:[#allocation5 + $0x8] sm:$0xff] %vm404, %v414
          %419 = vst.msk [vmem:[#allocation5 + $0x10] sm:$0xff] %vm404, %v415
          %420 = vst.msk [vmem:[#allocation5 + $0x18] sm:$0xff] %vm404, %v416
        $region56: #{tpu_custom_call.1} parent=35 // pred_fallthru
          _
        %v421 = vld [vmem:[#allocation5] sm:$0xff]
        %v422 = vld [vmem:[#allocation5 + $0x8] sm:$0xff]
        %v423 = vld [vmem:[#allocation5 + $0x10] sm:$0xff]
        %v424 = vld [vmem:[#allocation5 + $0x18] sm:$0xff]
        %v425 = vld [vmem:[%s329] sm:$0xff]
        %v426 = vld [vmem:[%s329 + $0x8] sm:$0xff]
        %v427 = vld [vmem:[%s329 + $0x10] sm:$0xff]
        %v428 = vld [vmem:[%s329 + $0x18] sm:$0xff]
        %v429 = vld [vmem:[%s347] sm:$0xff]
        %v430 = vld [vmem:[%s347 + $0x8] sm:$0xff]
        %v431 = vld [vmem:[%s347 + $0x10] sm:$0xff]
        %v432 = vld [vmem:[%s347 + $0x18] sm:$0xff]
        %v433 = vld [vmem:[%s338] sm:$0xff]
        %vm434 = vcmask 261120
        %v436 = vsel %vm434, %v421, 0
        %v439 = vsel %vm434, %v425, 0
        %441 = vmatprep.subr.mxu0 0.0
        %442 = vmatpush1.xpose.msra.mxu0 %v439
        %443 = vmatprep.subr.mxu0 0.0
        %444 = vmatpush1.xpose.msra.mxu0 0.0
        %445 = vmatprep.subr.mxu0 0.0
        %446 = vmatpush1.xpose.msra.mxu0 0.0
        %447 = vmatprep.subr.mxu0 0.0
        %448 = vmatpush1.xpose.msra.mxu0 0.0
        %449 = vmatprep.subr.mxu0 0.0
        %450 = vmatpush1.xpose.msra.mxu0 0.0
        %451 = vmatprep.subr.mxu0 0.0
        %452 = vmatpush1.xpose.msra.mxu0 0.0
        %453 = vmatprep.subr.mxu0 0.0
        %454 = vmatpush1.xpose.msra.mxu0 0.0
        %455 = vmatprep.subr.mxu0 0.0
        %456 = vmatpush1.xpose.msra.mxu0 0.0
        %457 = vmatprep.subr.mxu0 0.0
        %458 = vmatpush1.xpose.msra.mxu0 0.0
        %459 = vmatprep.subr.mxu0 0.0
        %460 = vmatpush1.xpose.msra.mxu0 0.0
        %461 = vmatprep.subr.mxu0 0.0
        %462 = vmatpush1.xpose.msra.mxu0 0.0
        %463 = vmatprep.subr.mxu0 0.0
        %464 = vmatpush1.xpose.msra.mxu0 0.0
        %465 = vmatprep.subr.mxu0 0.0
        %466 = vmatpush1.xpose.msra.mxu0 0.0
        %467 = vmatprep.subr.mxu0 0.0
        %468 = vmatpush1.xpose.msra.mxu0 0.0
        %469 = vmatprep.subr.mxu0 0.0
        %470 = vmatpush1.xpose.msra.mxu0 0.0
        %471 = vmatprep.subr.mxu0 0.0
        %472 = vmatpush1.xpose.msra.mxu0 0.0
        %473 = vmatprep.subr.mxu0 0.0
        %474 = vmatpush1.xpose.msra.mxu0 0.0
        %475 = vmatprep.subr.mxu0 0.0
        %476 = vmatpush1.xpose.msra.mxu0 0.0
        %477 = vmatprep.subr.mxu0 0.0
        %478 = vmatpush1.xpose.msra.mxu0 0.0
        %479 = vmatprep.subr.mxu0 0.0
        %480 = vmatpush1.xpose.msra.mxu0 0.0
        %481 = vmatprep.subr.mxu0 0.0
        %482 = vmatpush1.xpose.msra.mxu0 0.0
        %483 = vmatprep.subr.mxu0 0.0
        %484 = vmatpush1.xpose.msra.mxu0 0.0
        %485 = vmatprep.subr.mxu0 0.0
        %486 = vmatpush1.xpose.msra.mxu0 0.0
        %487 = vmatprep.subr.mxu0 0.0
        %488 = vmatpush1.xpose.msra.mxu0 0.0
        %489 = vmatprep.subr.mxu0 0.0
        %490 = vmatpush1.xpose.msra.mxu0 0.0
        %491 = vmatprep.subr.mxu0 0.0
        %492 = vmatpush1.xpose.msra.mxu0 0.0
        %493 = vmatprep.subr.mxu0 0.0
        %494 = vmatpush1.xpose.msra.mxu0 0.0
        %495 = vmatprep.subr.mxu0 0.0
        %496 = vmatpush1.xpose.msra.mxu0 0.0
        %497 = vmatprep.subr.mxu0 0.0
        %498 = vmatpush1.xpose.msra.mxu0 0.0
        %499 = vmatprep.subr.mxu0 0.0
        %500 = vmatpush1.xpose.msra.mxu0 0.0
        %501 = vmatprep.subr.mxu0 0.0
        %502 = vmatpush1.xpose.msra.mxu0 0.0
        %503 = vmatprep.subr.mxu0 0.0
        %504 = vmatpush1.xpose.msra.mxu0 0.0
        %505 = vmatprep.mubr.f32.mxu0 0.0
        %506 = vmatmul.mubr.f32.gmra.mrb[0].mxu0 %v436
        %v507 = vpop.f32.mrb[0].mxu0
        %v508 = vadd.f32 %v433, %v507
        %v509 = vpop.f32.mrb[0].mxu0
        %510 = vdwg.mxu0
        %v512 = vsel %vm434, %v422, 0
        %v515 = vsel %vm434, %v426, 0
        %517 = vmatprep.subr.mxu0 0.0
        %518 = vmatpush1.xpose.msra.mxu0 %v515
        %519 = vmatprep.subr.mxu0 0.0
        %520 = vmatpush1.xpose.msra.mxu0 0.0
        %521 = vmatprep.subr.mxu0 0.0
        %522 = vmatpush1.xpose.msra.mxu0 0.0
        %523 = vmatprep.subr.mxu0 0.0
        %524 = vmatpush1.xpose.msra.mxu0 0.0
        %525 = vmatprep.subr.mxu0 0.0
        %526 = vmatpush1.xpose.msra.mxu0 0.0
        %527 = vmatprep.subr.mxu0 0.0
        %528 = vmatpush1.xpose.msra.mxu0 0.0
        %529 = vmatprep.subr.mxu0 0.0
        %530 = vmatpush1.xpose.msra.mxu0 0.0
        %531 = vmatprep.subr.mxu0 0.0
        %532 = vmatpush1.xpose.msra.mxu0 0.0
        %533 = vmatprep.subr.mxu0 0.0
        %534 = vmatpush1.xpose.msra.mxu0 0.0
        %535 = vmatprep.subr.mxu0 0.0
        %536 = vmatpush1.xpose.msra.mxu0 0.0
        %537 = vmatprep.subr.mxu0 0.0
        %538 = vmatpush1.xpose.msra.mxu0 0.0
        %539 = vmatprep.subr.mxu0 0.0
        %540 = vmatpush1.xpose.msra.mxu0 0.0
        %541 = vmatprep.subr.mxu0 0.0
        %542 = vmatpush1.xpose.msra.mxu0 0.0
        %543 = vmatprep.subr.mxu0 0.0
        %544 = vmatpush1.xpose.msra.mxu0 0.0
        %545 = vmatprep.subr.mxu0 0.0
        %546 = vmatpush1.xpose.msra.mxu0 0.0
        %547 = vmatprep.subr.mxu0 0.0
        %548 = vmatpush1.xpose.msra.mxu0 0.0
        %549 = vmatprep.subr.mxu0 0.0
        %550 = vmatpush1.xpose.msra.mxu0 0.0
        %551 = vmatprep.subr.mxu0 0.0
        %552 = vmatpush1.xpose.msra.mxu0 0.0
        %553 = vmatprep.subr.mxu0 0.0
        %554 = vmatpush1.xpose.msra.mxu0 0.0
        %555 = vmatprep.subr.mxu0 0.0
        %556 = vmatpush1.xpose.msra.mxu0 0.0
        %557 = vmatprep.subr.mxu0 0.0
        %558 = vmatpush1.xpose.msra.mxu0 0.0
        %559 = vmatprep.subr.mxu0 0.0
        %560 = vmatpush1.xpose.msra.mxu0 0.0
        %561 = vmatprep.subr.mxu0 0.0
        %562 = vmatpush1.xpose.msra.mxu0 0.0
        %563 = vmatprep.subr.mxu0 0.0
        %564 = vmatpush1.xpose.msra.mxu0 0.0
        %565 = vmatprep.subr.mxu0 0.0
        %566 = vmatpush1.xpose.msra.mxu0 0.0
        %567 = vmatprep.subr.mxu0 0.0
        %568 = vmatpush1.xpose.msra.mxu0 0.0
        %569 = vmatprep.subr.mxu0 0.0
        %570 = vmatpush1.xpose.msra.mxu0 0.0
        %571 = vmatprep.subr.mxu0 0.0
        %572 = vmatpush1.xpose.msra.mxu0 0.0
        %573 = vmatprep.subr.mxu0 0.0
        %574 = vmatpush1.xpose.msra.mxu0 0.0
        %575 = vmatprep.subr.mxu0 0.0
        %576 = vmatpush1.xpose.msra.mxu0 0.0
        %577 = vmatprep.subr.mxu0 0.0
        %578 = vmatpush1.xpose.msra.mxu0 0.0
        %579 = vmatprep.subr.mxu0 0.0
        %580 = vmatpush1.xpose.msra.mxu0 0.0
        %581 = vmatprep.mubr.f32.mxu0 0.0
        %582 = vmatmul.mubr.f32.gmra.mrb[0].mxu0 %v512
        %v583 = vpop.f32.mrb[0].mxu0
        %v584 = vadd.f32 %v433, %v583
        %v585 = vpop.f32.mrb[0].mxu0
        %586 = vdwg.mxu0
        %v588 = vsel %vm434, %v423, 0
        %v591 = vsel %vm434, %v427, 0
        %593 = vmatprep.subr.mxu0 0.0
        %594 = vmatpush1.xpose.msra.mxu0 %v591
        %595 = vmatprep.subr.mxu0 0.0
        %596 = vmatpush1.xpose.msra.mxu0 0.0
        %597 = vmatprep.subr.mxu0 0.0
        %598 = vmatpush1.xpose.msra.mxu0 0.0
        %599 = vmatprep.subr.mxu0 0.0
        %600 = vmatpush1.xpose.msra.mxu0 0.0
        %601 = vmatprep.subr.mxu0 0.0
        %602 = vmatpush1.xpose.msra.mxu0 0.0
        %603 = vmatprep.subr.mxu0 0.0
        %604 = vmatpush1.xpose.msra.mxu0 0.0
        %605 = vmatprep.subr.mxu0 0.0
        %606 = vmatpush1.xpose.msra.mxu0 0.0
        %607 = vmatprep.subr.mxu0 0.0
        %608 = vmatpush1.xpose.msra.mxu0 0.0
        %609 = vmatprep.subr.mxu0 0.0
        %610 = vmatpush1.xpose.msra.mxu0 0.0
        %611 = vmatprep.subr.mxu0 0.0
        %612 = vmatpush1.xpose.msra.mxu0 0.0
        %613 = vmatprep.subr.mxu0 0.0
        %614 = vmatpush1.xpose.msra.mxu0 0.0
        %615 = vmatprep.subr.mxu0 0.0
        %616 = vmatpush1.xpose.msra.mxu0 0.0
        %617 = vmatprep.subr.mxu0 0.0
        %618 = vmatpush1.xpose.msra.mxu0 0.0
        %619 = vmatprep.subr.mxu0 0.0
        %620 = vmatpush1.xpose.msra.mxu0 0.0
        %621 = vmatprep.subr.mxu0 0.0
        %622 = vmatpush1.xpose.msra.mxu0 0.0
        %623 = vmatprep.subr.mxu0 0.0
        %624 = vmatpush1.xpose.msra.mxu0 0.0
        %625 = vmatprep.subr.mxu0 0.0
        %626 = vmatpush1.xpose.msra.mxu0 0.0
        %627 = vmatprep.subr.mxu0 0.0
        %628 = vmatpush1.xpose.msra.mxu0 0.0
        %629 = vmatprep.subr.mxu0 0.0
        %630 = vmatpush1.xpose.msra.mxu0 0.0
        %631 = vmatprep.subr.mxu0 0.0
        %632 = vmatpush1.xpose.msra.mxu0 0.0
        %633 = vmatprep.subr.mxu0 0.0
        %634 = vmatpush1.xpose.msra.mxu0 0.0
        %635 = vmatprep.subr.mxu0 0.0
        %636 = vmatpush1.xpose.msra.mxu0 0.0
        %637 = vmatprep.subr.mxu0 0.0
        %638 = vmatpush1.xpose.msra.mxu0 0.0
        %639 = vmatprep.subr.mxu0 0.0
        %640 = vmatpush1.xpose.msra.mxu0 0.0
        %641 = vmatprep.subr.mxu0 0.0
        %642 = vmatpush1.xpose.msra.mxu0 0.0
        %643 = vmatprep.subr.mxu0 0.0
        %644 = vmatpush1.xpose.msra.mxu0 0.0
        %645 = vmatprep.subr.mxu0 0.0
        %646 = vmatpush1.xpose.msra.mxu0 0.0
        %647 = vmatprep.subr.mxu0 0.0
        %648 = vmatpush1.xpose.msra.mxu0 0.0
        %649 = vmatprep.subr.mxu0 0.0
        %650 = vmatpush1.xpose.msra.mxu0 0.0
        %651 = vmatprep.subr.mxu0 0.0
        %652 = vmatpush1.xpose.msra.mxu0 0.0
        %653 = vmatprep.subr.mxu0 0.0
        %654 = vmatpush1.xpose.msra.mxu0 0.0
        %655 = vmatprep.subr.mxu0 0.0
        %656 = vmatpush1.xpose.msra.mxu0 0.0
        %657 = vmatprep.mubr.f32.mxu0 0.0
        %658 = vmatmul.mubr.f32.gmra.mrb[0].mxu0 %v588
        %v659 = vpop.f32.mrb[0].mxu0
        %v660 = vadd.f32 %v433, %v659
        %v661 = vpop.f32.mrb[0].mxu0
        %662 = vdwg.mxu0
        %v664 = vsel %vm434, %v424, 0
        %v667 = vsel %vm434, %v428, 0
        %669 = vmatprep.subr.mxu0 0.0
        %670 = vmatpush1.xpose.msra.mxu0 %v667
        %671 = vmatprep.subr.mxu0 0.0
        %672 = vmatpush1.xpose.msra.mxu0 0.0
        %673 = vmatprep.subr.mxu0 0.0
        %674 = vmatpush1.xpose.msra.mxu0 0.0
        %675 = vmatprep.subr.mxu0 0.0
        %676 = vmatpush1.xpose.msra.mxu0 0.0
        %677 = vmatprep.subr.mxu0 0.0
        %678 = vmatpush1.xpose.msra.mxu0 0.0
        %679 = vmatprep.subr.mxu0 0.0
        %680 = vmatpush1.xpose.msra.mxu0 0.0
        %681 = vmatprep.subr.mxu0 0.0
        %682 = vmatpush1.xpose.msra.mxu0 0.0
        %683 = vmatprep.subr.mxu0 0.0
        %684 = vmatpush1.xpose.msra.mxu0 0.0
        %685 = vmatprep.subr.mxu0 0.0
        %686 = vmatpush1.xpose.msra.mxu0 0.0
        %687 = vmatprep.subr.mxu0 0.0
        %688 = vmatpush1.xpose.msra.mxu0 0.0
        %689 = vmatprep.subr.mxu0 0.0
        %690 = vmatpush1.xpose.msra.mxu0 0.0
        %691 = vmatprep.subr.mxu0 0.0
        %692 = vmatpush1.xpose.msra.mxu0 0.0
        %693 = vmatprep.subr.mxu0 0.0
        %694 = vmatpush1.xpose.msra.mxu0 0.0
        %695 = vmatprep.subr.mxu0 0.0
        %696 = vmatpush1.xpose.msra.mxu0 0.0
        %697 = vmatprep.subr.mxu0 0.0
        %698 = vmatpush1.xpose.msra.mxu0 0.0
        %699 = vmatprep.subr.mxu0 0.0
        %700 = vmatpush1.xpose.msra.mxu0 0.0
        %701 = vmatprep.subr.mxu0 0.0
        %702 = vmatpush1.xpose.msra.mxu0 0.0
        %703 = vmatprep.subr.mxu0 0.0
        %704 = vmatpush1.xpose.msra.mxu0 0.0
        %705 = vmatprep.subr.mxu0 0.0
        %706 = vmatpush1.xpose.msra.mxu0 0.0
        %707 = vmatprep.subr.mxu0 0.0
        %708 = vmatpush1.xpose.msra.mxu0 0.0
        %709 = vmatprep.subr.mxu0 0.0
        %710 = vmatpush1.xpose.msra.mxu0 0.0
        %711 = vmatprep.subr.mxu0 0.0
        %712 = vmatpush1.xpose.msra.mxu0 0.0
        %713 = vmatprep.subr.mxu0 0.0
        %714 = vmatpush1.xpose.msra.mxu0 0.0
        %715 = vmatprep.subr.mxu0 0.0
        %716 = vmatpush1.xpose.msra.mxu0 0.0
        %717 = vmatprep.subr.mxu0 0.0
        %718 = vmatpush1.xpose.msra.mxu0 0.0
        %719 = vmatprep.subr.mxu0 0.0
        %720 = vmatpush1.xpose.msra.mxu0 0.0
        %721 = vmatprep.subr.mxu0 0.0
        %722 = vmatpush1.xpose.msra.mxu0 0.0
        %723 = vmatprep.subr.mxu0 0.0
        %724 = vmatpush1.xpose.msra.mxu0 0.0
        %725 = vmatprep.subr.mxu0 0.0
        %726 = vmatpush1.xpose.msra.mxu0 0.0
        %727 = vmatprep.subr.mxu0 0.0
        %728 = vmatpush1.xpose.msra.mxu0 0.0
        %729 = vmatprep.subr.mxu0 0.0
        %730 = vmatpush1.xpose.msra.mxu0 0.0
        %731 = vmatprep.subr.mxu0 0.0
        %732 = vmatpush1.xpose.msra.mxu0 0.0
        %733 = vmatprep.mubr.f32.mxu0 0.0
        %734 = vmatmul.mubr.f32.gmra.mrb[0].mxu0 %v664
        %v735 = vpop.f32.mrb[0].mxu0
        %v736 = vadd.f32 %v433, %v735
        %v737 = vpop.f32.mrb[0].mxu0
        %738 = vdwg.mxu0
        %v739 = vld [vmem:[#allocation2] sm:$0xff]
        %v740 = vld [vmem:[#allocation2 + $0x8] sm:$0xff]
        %v741 = vld [vmem:[#allocation2 + $0x10] sm:$0xff]
        %v742 = vld [vmem:[#allocation2 + $0x18] sm:$0xff]
        %vm743 = vcmask 64512
        %v744 = vsel %vm743, %v508, -inf
        %745 = vmax.xlane.f32.xlu0 %v744
        %v746 = vpop.xlane.xlu0 %745
        %v747 = vsel %vm743, %v584, -inf
        %748 = vmax.xlane.f32.xlu0 %v747
        %v749 = vpop.xlane.xlu0 %748
        %v750 = vsel %vm743, %v660, -inf
        %751 = vmax.xlane.f32.xlu0 %v750
        %v752 = vpop.xlane.xlu0 %751
        %v753 = vsel %vm743, %v736, -inf
        %754 = vmax.xlane.f32.xlu0 %v753
        %v755 = vpop.xlane.xlu0 %754
        %v756 = vmax.f32 %v739, %v746
        %v757 = vmax.f32 %v740, %v749
        %v758 = vmax.f32 %v741, %v752
        %v759 = vmax.f32 %v742, %v755
        %v760 = vmax.f32 %v756, -3.4028235e+38
        %v761 = vmax.f32 %v757, -3.4028235e+38
        %v762 = vmax.f32 %v758, -3.4028235e+38
        %v763 = vmax.f32 %v759, -3.4028235e+38
        %v764 = vsub.f32 %v739, %v760
        %v765 = vsub.f32 %v740, %v761
        %v766 = vsub.f32 %v741, %v762
        %v767 = vsub.f32 %v742, %v763
        %v768 = vmul.f32 %v764, 1.442695
        %v769 = vpow.pop %v768
        %v770 = vmul.f32 %v765, 1.442695
        %v771 = vpow.pop %v770
        %v772 = vmul.f32 %v766, 1.442695
        %v773 = vpow.pop %v772
        %v774 = vmul.f32 %v767, 1.442695
        %v775 = vpow.pop %v774
        %777 = vset.pattern.permute.xlu0 0
        %778 = vperm.xlu0 %777, %v760
        %v779 = vpop.permute.xlu0 %778
        %782 = vset.pattern.permute.xlu0 0
        %783 = vperm.xlu0 %782, %v761
        %v784 = vpop.permute.xlu0 %783
        %787 = vset.pattern.permute.xlu0 0
        %788 = vperm.xlu0 %787, %v762
        %v789 = vpop.permute.xlu0 %788
        %792 = vset.pattern.permute.xlu0 0
        %793 = vperm.xlu0 %792, %v763
        %v794 = vpop.permute.xlu0 %793
        %v796 = vsub.f32 %v508, %v779
        %v797 = vsub.f32 %v584, %v784
        %v798 = vsub.f32 %v660, %v789
        %v799 = vsub.f32 %v736, %v794
        %v800 = vmul.f32 %v796, 1.442695
        %v801 = vpow.pop %v800
        %v802 = vmul.f32 %v797, 1.442695
        %v803 = vpow.pop %v802
        %v804 = vmul.f32 %v798, 1.442695
        %v805 = vpow.pop %v804
        %v806 = vmul.f32 %v799, 1.442695
        %v807 = vpow.pop %v806
        %v808 = vld [vmem:[#allocation3] sm:$0xff]
        %v809 = vld [vmem:[#allocation3 + $0x8] sm:$0xff]
        %v810 = vld [vmem:[#allocation3 + $0x10] sm:$0xff]
        %v811 = vld [vmem:[#allocation3 + $0x18] sm:$0xff]
        %v812 = vmul.f32 %v769, %v808
        %v813 = vmul.f32 %v771, %v809
        %v814 = vmul.f32 %v773, %v810
        %v815 = vmul.f32 %v775, %v811
        %v816 = vsel %vm743, %v801, 0.0
        %817 = vadd.xlane.f32.xlu0 %v816
        %v818 = vpop.xlane.xlu0 %817
        %v819 = vsel %vm743, %v803, 0.0
        %820 = vadd.xlane.f32.xlu0 %v819
        %v821 = vpop.xlane.xlu0 %820
        %v822 = vsel %vm743, %v805, 0.0
        %823 = vadd.xlane.f32.xlu0 %v822
        %v824 = vpop.xlane.xlu0 %823
        %v825 = vsel %vm743, %v807, 0.0
        %826 = vadd.xlane.f32.xlu0 %v825
        %v827 = vpop.xlane.xlu0 %826
        %v828 = vadd.f32 %v812, %v818
        %v829 = vadd.f32 %v813, %v821
        %v830 = vadd.f32 %v814, %v824
        %v831 = vadd.f32 %v815, %v827
        %vm832 = vcmask 7168
        %833 = vst.msk [vmem:[#allocation3] sm:$0xff] %vm832, %v828
        %834 = vst.msk [vmem:[#allocation3 + $0x8] sm:$0xff] %vm832, %v829
        %835 = vst.msk [vmem:[#allocation3 + $0x10] sm:$0xff] %vm832, %v830
        %836 = vst.msk [vmem:[#allocation3 + $0x18] sm:$0xff] %vm832, %v831
        %v838 = vsel %vm743, %v801, 0
        %840 = vmatprep.subr.mxu0 0.0
        %841 = vmatpush1.msra.mxu0 %v429
        %842 = vmatprep.subr.mxu0 0.0
        %843 = vmatpush1.msra.mxu0 0.0
        %844 = vmatprep.subr.mxu0 0.0
        %845 = vmatpush1.msra.mxu0 0.0
        %846 = vmatprep.subr.mxu0 0.0
        %847 = vmatpush1.msra.mxu0 0.0
        %848 = vmatprep.subr.mxu0 0.0
        %849 = vmatpush1.msra.mxu0 0.0
        %850 = vmatprep.subr.mxu0 0.0
        %851 = vmatpush1.msra.mxu0 0.0
        %852 = vmatprep.subr.mxu0 0.0
        %853 = vmatpush1.msra.mxu0 0.0
        %854 = vmatprep.subr.mxu0 0.0
        %855 = vmatpush1.msra.mxu0 0.0
        %856 = vmatprep.subr.mxu0 0.0
        %857 = vmatpush1.msra.mxu0 0.0
        %858 = vmatprep.subr.mxu0 0.0
        %859 = vmatpush1.msra.mxu0 0.0
        %860 = vmatprep.subr.mxu0 0.0
        %861 = vmatpush1.msra.mxu0 0.0
        %862 = vmatprep.subr.mxu0 0.0
        %863 = vmatpush1.msra.mxu0 0.0
        %864 = vmatprep.subr.mxu0 0.0
        %865 = vmatpush1.msra.mxu0 0.0
        %866 = vmatprep.subr.mxu0 0.0
        %867 = vmatpush1.msra.mxu0 0.0
        %868 = vmatprep.subr.mxu0 0.0
        %869 = vmatpush1.msra.mxu0 0.0
        %870 = vmatprep.subr.mxu0 0.0
        %871 = vmatpush1.msra.mxu0 0.0
        %872 = vmatprep.subr.mxu0 0.0
        %873 = vmatpush1.msra.mxu0 0.0
        %874 = vmatprep.subr.mxu0 0.0
        %875 = vmatpush1.msra.mxu0 0.0
        %876 = vmatprep.subr.mxu0 0.0
        %877 = vmatpush1.msra.mxu0 0.0
        %878 = vmatprep.subr.mxu0 0.0
        %879 = vmatpush1.msra.mxu0 0.0
        %880 = vmatprep.subr.mxu0 0.0
        %881 = vmatpush1.msra.mxu0 0.0
        %882 = vmatprep.subr.mxu0 0.0
        %883 = vmatpush1.msra.mxu0 0.0
        %884 = vmatprep.subr.mxu0 0.0
        %885 = vmatpush1.msra.mxu0 0.0
        %886 = vmatprep.subr.mxu0 0.0
        %887 = vmatpush1.msra.mxu0 0.0
        %888 = vmatprep.subr.mxu0 0.0
        %889 = vmatpush1.msra.mxu0 0.0
        %890 = vmatprep.subr.mxu0 0.0
        %891 = vmatpush1.msra.mxu0 0.0
        %892 = vmatprep.subr.mxu0 0.0
        %893 = vmatpush1.msra.mxu0 0.0
        %894 = vmatprep.subr.mxu0 0.0
        %895 = vmatpush1.msra.mxu0 0.0
        %896 = vmatprep.subr.mxu0 0.0
        %897 = vmatpush1.msra.mxu0 0.0
        %898 = vmatprep.subr.mxu0 0.0
        %899 = vmatpush1.msra.mxu0 0.0
        %900 = vmatprep.subr.mxu0 0.0
        %901 = vmatpush1.msra.mxu0 0.0
        %902 = vmatprep.subr.mxu0 0.0
        %903 = vmatpush1.msra.mxu0 0.0
        %904 = vmatprep.mubr.f32.mxu0 0.0
        %905 = vmatmul.mubr.f32.gmra.mrb[0].mxu0 %v838
        %v906 = vpop.f32.mrb[0].mxu0
        %v907 = vadd.f32 0.0, %v906
        %v908 = vpop.f32.mrb[0].mxu0
        %909 = vdwg.mxu0
        %v911 = vsel %vm743, %v803, 0
        %913 = vmatprep.subr.mxu0 0.0
        %914 = vmatpush1.msra.mxu0 %v430
        %915 = vmatprep.subr.mxu0 0.0
        %916 = vmatpush1.msra.mxu0 0.0
        %917 = vmatprep.subr.mxu0 0.0
        %918 = vmatpush1.msra.mxu0 0.0
        %919 = vmatprep.subr.mxu0 0.0
        %920 = vmatpush1.msra.mxu0 0.0
        %921 = vmatprep.subr.mxu0 0.0
        %922 = vmatpush1.msra.mxu0 0.0
        %923 = vmatprep.subr.mxu0 0.0
        %924 = vmatpush1.msra.mxu0 0.0
        %925 = vmatprep.subr.mxu0 0.0
        %926 = vmatpush1.msra.mxu0 0.0
        %927 = vmatprep.subr.mxu0 0.0
        %928 = vmatpush1.msra.mxu0 0.0
        %929 = vmatprep.subr.mxu0 0.0
        %930 = vmatpush1.msra.mxu0 0.0
        %931 = vmatprep.subr.mxu0 0.0
        %932 = vmatpush1.msra.mxu0 0.0
        %933 = vmatprep.subr.mxu0 0.0
        %934 = vmatpush1.msra.mxu0 0.0
        %935 = vmatprep.subr.mxu0 0.0
        %936 = vmatpush1.msra.mxu0 0.0
        %937 = vmatprep.subr.mxu0 0.0
        %938 = vmatpush1.msra.mxu0 0.0
        %939 = vmatprep.subr.mxu0 0.0
        %940 = vmatpush1.msra.mxu0 0.0
        %941 = vmatprep.subr.mxu0 0.0
        %942 = vmatpush1.msra.mxu0 0.0
        %943 = vmatprep.subr.mxu0 0.0
        %944 = vmatpush1.msra.mxu0 0.0
        %945 = vmatprep.subr.mxu0 0.0
        %946 = vmatpush1.msra.mxu0 0.0
        %947 = vmatprep.subr.mxu0 0.0
        %948 = vmatpush1.msra.mxu0 0.0
        %949 = vmatprep.subr.mxu0 0.0
        %950 = vmatpush1.msra.mxu0 0.0
        %951 = vmatprep.subr.mxu0 0.0
        %952 = vmatpush1.msra.mxu0 0.0
        %953 = vmatprep.subr.mxu0 0.0
        %954 = vmatpush1.msra.mxu0 0.0
        %955 = vmatprep.subr.mxu0 0.0
        %956 = vmatpush1.msra.mxu0 0.0
        %957 = vmatprep.subr.mxu0 0.0
        %958 = vmatpush1.msra.mxu0 0.0
        %959 = vmatprep.subr.mxu0 0.0
        %960 = vmatpush1.msra.mxu0 0.0
        %961 = vmatprep.subr.mxu0 0.0
        %962 = vmatpush1.msra.mxu0 0.0
        %963 = vmatprep.subr.mxu0 0.0
        %964 = vmatpush1.msra.mxu0 0.0
        %965 = vmatprep.subr.mxu0 0.0
        %966 = vmatpush1.msra.mxu0 0.0
        %967 = vmatprep.subr.mxu0 0.0
        %968 = vmatpush1.msra.mxu0 0.0
        %969 = vmatprep.subr.mxu0 0.0
        %970 = vmatpush1.msra.mxu0 0.0
        %971 = vmatprep.subr.mxu0 0.0
        %972 = vmatpush1.msra.mxu0 0.0
        %973 = vmatprep.subr.mxu0 0.0
        %974 = vmatpush1.msra.mxu0 0.0
        %975 = vmatprep.subr.mxu0 0.0
        %976 = vmatpush1.msra.mxu0 0.0
        %977 = vmatprep.mubr.f32.mxu0 0.0
        %978 = vmatmul.mubr.f32.gmra.mrb[0].mxu0 %v911
        %v979 = vpop.f32.mrb[0].mxu0
        %v980 = vadd.f32 0.0, %v979
        %v981 = vpop.f32.mrb[0].mxu0
        %982 = vdwg.mxu0
        %v984 = vsel %vm743, %v805, 0
        %986 = vmatprep.subr.mxu0 0.0
        %987 = vmatpush1.msra.mxu0 %v431
        %988 = vmatprep.subr.mxu0 0.0
        %989 = vmatpush1.msra.mxu0 0.0
        %990 = vmatprep.subr.mxu0 0.0
        %991 = vmatpush1.msra.mxu0 0.0
        %992 = vmatprep.subr.mxu0 0.0
        %993 = vmatpush1.msra.mxu0 0.0
        %994 = vmatprep.subr.mxu0 0.0
        %995 = vmatpush1.msra.mxu0 0.0
        %996 = vmatprep.subr.mxu0 0.0
        %997 = vmatpush1.msra.mxu0 0.0
        %998 = vmatprep.subr.mxu0 0.0
        %999 = vmatpush1.msra.mxu0 0.0
        %1000 = vmatprep.subr.mxu0 0.0
        %1001 = vmatpush1.msra.mxu0 0.0
        %1002 = vmatprep.subr.mxu0 0.0
        %1003 = vmatpush1.msra.mxu0 0.0
        %1004 = vmatprep.subr.mxu0 0.0
        %1005 = vmatpush1.msra.mxu0 0.0
        %1006 = vmatprep.subr.mxu0 0.0
        %1007 = vmatpush1.msra.mxu0 0.0
        %1008 = vmatprep.subr.mxu0 0.0
        %1009 = vmatpush1.msra.mxu0 0.0
        %1010 = vmatprep.subr.mxu0 0.0
        %1011 = vmatpush1.msra.mxu0 0.0
        %1012 = vmatprep.subr.mxu0 0.0
        %1013 = vmatpush1.msra.mxu0 0.0
        %1014 = vmatprep.subr.mxu0 0.0
        %1015 = vmatpush1.msra.mxu0 0.0
        %1016 = vmatprep.subr.mxu0 0.0
        %1017 = vmatpush1.msra.mxu0 0.0
        %1018 = vmatprep.subr.mxu0 0.0
        %1019 = vmatpush1.msra.mxu0 0.0
        %1020 = vmatprep.subr.mxu0 0.0
        %1021 = vmatpush1.msra.mxu0 0.0
        %1022 = vmatprep.subr.mxu0 0.0
        %1023 = vmatpush1.msra.mxu0 0.0
        %1024 = vmatprep.subr.mxu0 0.0
        %1025 = vmatpush1.msra.mxu0 0.0
        %1026 = vmatprep.subr.mxu0 0.0
        %1027 = vmatpush1.msra.mxu0 0.0
        %1028 = vmatprep.subr.mxu0 0.0
        %1029 = vmatpush1.msra.mxu0 0.0
        %1030 = vmatprep.subr.mxu0 0.0
        %1031 = vmatpush1.msra.mxu0 0.0
        %1032 = vmatprep.subr.mxu0 0.0
        %1033 = vmatpush1.msra.mxu0 0.0
        %1034 = vmatprep.subr.mxu0 0.0
        %1035 = vmatpush1.msra.mxu0 0.0
        %1036 = vmatprep.subr.mxu0 0.0
        %1037 = vmatpush1.msra.mxu0 0.0
        %1038 = vmatprep.subr.mxu0 0.0
        %1039 = vmatpush1.msra.mxu0 0.0
        %1040 = vmatprep.subr.mxu0 0.0
        %1041 = vmatpush1.msra.mxu0 0.0
        %1042 = vmatprep.subr.mxu0 0.0
        %1043 = vmatpush1.msra.mxu0 0.0
        %1044 = vmatprep.subr.mxu0 0.0
        %1045 = vmatpush1.msra.mxu0 0.0
        %1046 = vmatprep.subr.mxu0 0.0
        %1047 = vmatpush1.msra.mxu0 0.0
        %1048 = vmatprep.subr.mxu0 0.0
        %1049 = vmatpush1.msra.mxu0 0.0
        %1050 = vmatprep.mubr.f32.mxu0 0.0
        %1051 = vmatmul.mubr.f32.gmra.mrb[0].mxu0 %v984
        %v1052 = vpop.f32.mrb[0].mxu0
        %v1053 = vadd.f32 0.0, %v1052
        %v1054 = vpop.f32.mrb[0].mxu0
        %1055 = vdwg.mxu0
        %v1057 = vsel %vm743, %v807, 0
        %1059 = vmatprep.subr.mxu0 0.0
        %1060 = vmatpush1.msra.mxu0 %v432
        %1061 = vmatprep.subr.mxu0 0.0
        %1062 = vmatpush1.msra.mxu0 0.0
        %1063 = vmatprep.subr.mxu0 0.0
        %1064 = vmatpush1.msra.mxu0 0.0
        %1065 = vmatprep.subr.mxu0 0.0
        %1066 = vmatpush1.msra.mxu0 0.0
        %1067 = vmatprep.subr.mxu0 0.0
        %1068 = vmatpush1.msra.mxu0 0.0
        %1069 = vmatprep.subr.mxu0 0.0
        %1070 = vmatpush1.msra.mxu0 0.0
        %1071 = vmatprep.subr.mxu0 0.0
        %1072 = vmatpush1.msra.mxu0 0.0
        %1073 = vmatprep.subr.mxu0 0.0
        %1074 = vmatpush1.msra.mxu0 0.0
        %1075 = vmatprep.subr.mxu0 0.0
        %1076 = vmatpush1.msra.mxu0 0.0
        %1077 = vmatprep.subr.mxu0 0.0
        %1078 = vmatpush1.msra.mxu0 0.0
        %1079 = vmatprep.subr.mxu0 0.0
        %1080 = vmatpush1.msra.mxu0 0.0
        %1081 = vmatprep.subr.mxu0 0.0
        %1082 = vmatpush1.msra.mxu0 0.0
        %1083 = vmatprep.subr.mxu0 0.0
        %1084 = vmatpush1.msra.mxu0 0.0
        %1085 = vmatprep.subr.mxu0 0.0
        %1086 = vmatpush1.msra.mxu0 0.0
        %1087 = vmatprep.subr.mxu0 0.0
        %1088 = vmatpush1.msra.mxu0 0.0
        %1089 = vmatprep.subr.mxu0 0.0
        %1090 = vmatpush1.msra.mxu0 0.0
        %1091 = vmatprep.subr.mxu0 0.0
        %1092 = vmatpush1.msra.mxu0 0.0
        %1093 = vmatprep.subr.mxu0 0.0
        %1094 = vmatpush1.msra.mxu0 0.0
        %1095 = vmatprep.subr.mxu0 0.0
        %1096 = vmatpush1.msra.mxu0 0.0
        %1097 = vmatprep.subr.mxu0 0.0
        %1098 = vmatpush1.msra.mxu0 0.0
        %1099 = vmatprep.subr.mxu0 0.0
        %1100 = vmatpush1.msra.mxu0 0.0
        %1101 = vmatprep.subr.mxu0 0.0
        %1102 = vmatpush1.msra.mxu0 0.0
        %1103 = vmatprep.subr.mxu0 0.0
        %1104 = vmatpush1.msra.mxu0 0.0
        %1105 = vmatprep.subr.mxu0 0.0
        %1106 = vmatpush1.msra.mxu0 0.0
        %1107 = vmatprep.subr.mxu0 0.0
        %1108 = vmatpush1.msra.mxu0 0.0
        %1109 = vmatprep.subr.mxu0 0.0
        %1110 = vmatpush1.msra.mxu0 0.0
        %1111 = vmatprep.subr.mxu0 0.0
        %1112 = vmatpush1.msra.mxu0 0.0
        %1113 = vmatprep.subr.mxu0 0.0
        %1114 = vmatpush1.msra.mxu0 0.0
        %1115 = vmatprep.subr.mxu0 0.0
        %1116 = vmatpush1.msra.mxu0 0.0
        %1117 = vmatprep.subr.mxu0 0.0
        %1118 = vmatpush1.msra.mxu0 0.0
        %1119 = vmatprep.subr.mxu0 0.0
        %1120 = vmatpush1.msra.mxu0 0.0
        %1121 = vmatprep.subr.mxu0 0.0
        %1122 = vmatpush1.msra.mxu0 0.0
        %1123 = vmatprep.mubr.f32.mxu0 0.0
        %1124 = vmatmul.mubr.f32.gmra.mrb[0].mxu0 %v1057
        %v1125 = vpop.f32.mrb[0].mxu0
        %v1126 = vadd.f32 0.0, %v1125
        %v1127 = vpop.f32.mrb[0].mxu0
        %1128 = vdwg.mxu0
        %v1129 = vld [vmem:[#allocation4] sm:$0xff]
        %v1130 = vld [vmem:[#allocation4 + $0x8] sm:$0xff]
        %v1131 = vld [vmem:[#allocation4 + $0x10] sm:$0xff]
        %v1132 = vld [vmem:[#allocation4 + $0x18] sm:$0xff]
        %1134 = vset.pattern.permute.xlu0 0
        %1135 = vperm.xlu0 %1134, %v769
        %v1136 = vpop.permute.xlu0 %1135
        %1139 = vset.pattern.permute.xlu0 0
        %1140 = vperm.xlu0 %1139, %v771
        %v1141 = vpop.permute.xlu0 %1140
        %1144 = vset.pattern.permute.xlu0 0
        %1145 = vperm.xlu0 %1144, %v773
        %v1146 = vpop.permute.xlu0 %1145
        %1149 = vset.pattern.permute.xlu0 0
        %1150 = vperm.xlu0 %1149, %v775
        %v1151 = vpop.permute.xlu0 %1150
        %v1153 = vmul.f32 %v1136, %v1129
        %v1154 = vmul.f32 %v1141, %v1130
        %v1155 = vmul.f32 %v1146, %v1131
        %v1156 = vmul.f32 %v1151, %v1132
        %v1157 = vadd.f32 %v1153, %v907
        %v1158 = vadd.f32 %v1154, %v980
        %v1159 = vadd.f32 %v1155, %v1053
        %v1160 = vadd.f32 %v1156, %v1126
        %1161 = vst.msk [vmem:[#allocation4] sm:$0xff] %vm434, %v1157
        %1162 = vst.msk [vmem:[#allocation4 + $0x8] sm:$0xff] %vm434, %v1158
        %1163 = vst.msk [vmem:[#allocation4 + $0x10] sm:$0xff] %vm434, %v1159
        %1164 = vst.msk [vmem:[#allocation4 + $0x18] sm:$0xff] %vm434, %v1160
        %1165 = vst.msk [vmem:[#allocation2] sm:$0xff] %vm832, %v760
        %1166 = vst.msk [vmem:[#allocation2 + $0x8] sm:$0xff] %vm832, %v761
        %1167 = vst.msk [vmem:[#allocation2 + $0x10] sm:$0xff] %vm832, %v762
        %1168 = vst.msk [vmem:[#allocation2 + $0x18] sm:$0xff] %vm832, %v763
        // Predicated region
        $region57: #{tpu_custom_call.1} parent=35 // pred_check
          %p1169 = pneg %p391
        $region58: #{tpu_custom_call.1} parent=35 // pred_check_branch
          %1171 = sbr.rel (%p1169) target = $region60
        $region59: #{tpu_custom_call.1} parent=35 // pred_region
          %v1172 = vld [vmem:[#allocation4] sm:$0xff]
          %v1173 = vld [vmem:[#allocation4 + $0x8] sm:$0xff]
          %v1174 = vld [vmem:[#allocation4 + $0x10] sm:$0xff]
          %v1175 = vld [vmem:[#allocation4 + $0x18] sm:$0xff]
          %v1176 = vld [vmem:[#allocation3] sm:$0xff]
          %v1177 = vld [vmem:[#allocation3 + $0x8] sm:$0xff]
          %v1178 = vld [vmem:[#allocation3 + $0x10] sm:$0xff]
          %v1179 = vld [vmem:[#allocation3 + $0x18] sm:$0xff]
          %1181 = vset.pattern.permute.xlu0 0
          %1182 = vperm.xlu0 %1181, %v1176
          %v1183 = vpop.permute.xlu0 %1182
          %1186 = vset.pattern.permute.xlu0 0
          %1187 = vperm.xlu0 %1186, %v1177
          %v1188 = vpop.permute.xlu0 %1187
          %1191 = vset.pattern.permute.xlu0 0
          %1192 = vperm.xlu0 %1191, %v1178
          %v1193 = vpop.permute.xlu0 %1192
          %1196 = vset.pattern.permute.xlu0 0
          %1197 = vperm.xlu0 %1196, %v1179
          %v1198 = vpop.permute.xlu0 %1197
          %v1200 = vrcp.pop %v1183
          %v1201 = vmul.f32 %v1172, %v1200
          %v1202 = vrcp.pop %v1188
          %v1203 = vmul.f32 %v1173, %v1202
          %v1204 = vrcp.pop %v1193
          %v1205 = vmul.f32 %v1174, %v1204
          %v1206 = vrcp.pop %v1198
          %v1207 = vmul.f32 %v1175, %v1206
          %1208 = vst.msk [vmem:[%s386] sm:$0xff] %vm434, %v1201
          %1209 = vst.msk [vmem:[%s386 + $0x8] sm:$0xff] %vm434, %v1203
          %1210 = vst.msk [vmem:[%s386 + $0x10] sm:$0xff] %vm434, %v1205
          %1211 = vst.msk [vmem:[%s386 + $0x18] sm:$0xff] %vm434, %v1207
        $region60: #{tpu_custom_call.1} parent=35 // pred_fallthru
          _
        %s1212 = sand.u32 %s185, 1
        %s1213 = scalar_lea.sflag [#allocation8], %s1212
        %s1214 = sand.u32 %s185, 1
        %s1215 = smul.addr %s1214, 32
        %s1216 = scalar_lea.vmem [#allocation14], %s1215
        // Predicated region
        $region61: #{tpu_custom_call.1} parent=35 // pred_check
          %p1217 = pneg %p195
        $region62: #{tpu_custom_call.1} parent=35 // pred_check_branch
          %1219 = sbr.rel (%p1217) target = $region64
        $region63: #{tpu_custom_call.1} parent=35 // pred_region
          %s1220 = smul.u32 4, %s35
          %s1222 = ssub.s32 512, 512
          %1223 = vsyncadd %s1213, %s1222
          %s1224 = sadd.s32 %s34, %s1220
          %s1225 = smul.addr %s33, 4
          %s1226 = sadd.s32 %s1224, %s1225
          %s1227 = smul.addr %s1226, 128
          %s1228 = scalar_lea.hbm %s4, %s1227
          %s1229 = sshll.u32 %s1216, 4
          %s1230 = int_to_ptr.vmem [resolvable:$true] %s1229
          %1235 = dma.vmem_to_hbm [thread:$0]  %s1230, 512, %s1228, %s1213, 128, 128, 8
        $region64: #{tpu_custom_call.1} parent=35 // pred_fallthru
          _
      $region36: #{tpu_custom_call.1} parent=5 // pred_fallthru
        _
      %p1236 = scmp.le.s32.totalorder 2, %s22
      // Predicated region
      $region65: #{tpu_custom_call.1} parent=5 // pred_check
        %p1237 = pneg %p1236
      $region66: #{tpu_custom_call.1} parent=5 // pred_check_branch
        %1239 = sbr.rel (%p1237) target = $region68
      $region67: #{tpu_custom_call.1} parent=5 // pred_region
        %s1240 = ssub.s32 %s22, 2
        // Predicated region
        $region69: #{tpu_custom_call.1} parent=67 // pred_check
          %p1241 = pneg %p201
        $region70: #{tpu_custom_call.1} parent=67 // pred_check_branch
          %1243 = sbr.rel (%p1241) target = $region72
        $region71: #{tpu_custom_call.1} parent=67 // pred_region
          %s1244 = sand.u32 %s186, 1
          %s1245 = scalar_lea.sflag [#allocation8], %s1244
          %s1246 = sand.u32 %s186, 1
          %s1247 = smul.addr %s1246, 32
          %s1248 = scalar_lea.vmem [#allocation14], %s1247
          %1249 = dma.done %s1245, 512
        $region72: #{tpu_custom_call.1} parent=67 // pred_fallthru
          _
      $region68: #{tpu_custom_call.1} parent=5 // pred_fallthru
        _
    $region6: #{tpu_custom_call.1} parent=1 // loop_footer
      %s26 = sadd.s32 1, %s22
    $region7: #{tpu_custom_call.1} parent=1 // loop_footer_branch
      %21 = sbr.rel target = $region3
    $region8: #{tpu_custom_call.1} parent=1 // loop_exit
      _
    %1250 = vsyncpa [#allocation7], 1
    %s1251 = scalar_lea.sflag [#allocation7], 1
    %1252 = vsyncpa %s1251, 1
    %1253 = vsyncpa [#allocation10], 1
    %s1254 = scalar_lea.sflag [#allocation10], 1
    %1255 = vsyncpa %s1254, 1
    %1256 = vsyncpa [#allocation13], 1
    %s1257 = scalar_lea.sflag [#allocation13], 1
    %1258 = vsyncpa %s1257, 1
    %1259 = vsyncpa [#allocation8], 1
    %s1260 = scalar_lea.sflag [#allocation8], 1
    %1261 = vsyncpa %s1260, 1

</llo_original>
